<compile_context>
chip_gen: v7x
topology: tpu7x:2x2x1
jax: 0.10.0
libtpu: 0.0.40
codegen_flags: <defaults>
</compile_context>

<pallas_src>
import jax
import jax.numpy as jnp
from jax import lax
from jax.experimental import pallas as pl
from jax.experimental.pallas import tpu as pltpu


def _zero_border(pad_ref, hp, wp, c):
    """Zero only the 1-px border of a (hp+2, wp+2, c) padded scratch."""
    z_row = jnp.zeros((1, wp + 2, c), pad_ref.dtype)
    pad_ref[pl.ds(0, 1), :, :] = z_row
    pad_ref[pl.ds(hp + 1, 1), :, :] = z_row
    z_col = jnp.zeros((hp, 1, c), pad_ref.dtype)
    pad_ref[pl.ds(1, hp), pl.ds(0, 1), :] = z_col
    pad_ref[pl.ds(1, hp), pl.ds(wp + 1, 1), :] = z_col


def _conv3x3_im2col(pad_ref, col_ref, w_ref, b_ref, hp, wp, c):
    """3x3 conv (padding=1) as one im2col matmul; BN-scale already folded into
    w_ref.  Returns relu(col @ w + b) with f32 accumulation, shape (hp*wp, co)."""
    for idx in range(9):
        dy, dx = idx // 3, idx % 3
        tap = pad_ref[pl.ds(dy, hp), pl.ds(dx, wp), :]            # (hp, wp, c) bf16
        col_ref[:, :, pl.ds(idx * c, c)] = tap
    col = col_ref[...].reshape(hp * wp, 9 * c)                    # bf16 patches
    acc = jnp.dot(col, w_ref[...], preferred_element_type=jnp.float32)
    return jnp.maximum(acc + b_ref[...], 0.0)                     # bias + ReLU (f32)


def _down_kernel(xwin_ref, w1_ref, b1_ref, w2_ref, b2_ref, out_ref,
                 pad1_ref, pad2_ref, col1_ref, col2_ref):
    # xwin_ref: (1, 4, hp, wp, c_in)  -- 4 = the 2x2 pooling-window taps
    # w1_ref:   (9*c_in,  c_mid) bf16 -- BN scale folded in
    # w2_ref:   (9*c_mid, c_out) bf16
    # b*_ref:   (1, C) f32            -- folded BN bias
    # out_ref:  (1, hp*wp, c_out)
    # pad*_ref: zero-bordered bf16 scratch (hp+2, wp+2, C)
    # col*_ref: bf16 im2col buffers (hp, wp, 9*C)
    hp = xwin_ref.shape[2]
    wp = xwin_ref.shape[3]
    c_in = xwin_ref.shape[4]
    c_mid = w1_ref.shape[1]

    _zero_border(pad1_ref, hp, wp, c_in)
    _zero_border(pad2_ref, hp, wp, c_mid)

    # ---- MaxPool2d(kernel_size=2, stride=2): max over the 4 window taps ----
    pooled = jnp.maximum(
        jnp.maximum(xwin_ref[0, 0], xwin_ref[0, 1]),
        jnp.maximum(xwin_ref[0, 2], xwin_ref[0, 3]),
    )  # (hp, wp, c_in) f32

    # ---- conv1 (3x3, pad 1, BN scale folded) + bias + ReLU ----
    pad1_ref[pl.ds(1, hp), pl.ds(1, wp), :] = pooled.astype(pad1_ref.dtype)
    h1 = _conv3x3_im2col(pad1_ref, col1_ref, w1_ref, b1_ref, hp, wp, c_in)

    # ---- conv2 (3x3, pad 1, BN scale folded) + bias + ReLU ----
    pad2_ref[pl.ds(1, hp), pl.ds(1, wp), :] = (
        h1.reshape(hp, wp, c_mid).astype(pad2_ref.dtype))
    h2 = _conv3x3_im2col(pad2_ref, col2_ref, w2_ref, b2_ref, hp, wp, c_mid)

    out_ref[0] = h2.astype(out_ref.dtype)


def down_forward(x_nchw, params):
    """Down.forward. Input NCHW (PyTorch convention), output NHWC."""
    w1_hwio, w2_hwio = params["w1_hwio"], params["w2_hwio"]
    s1, b1, s2, b2 = params["s1"], params["b1"], params["s2"], params["b2"]

    n, c_in, h, w = x_nchw.shape
    hp, wp = h // 2, w // 2            # MaxPool2d floor behavior
    c_mid = w1_hwio.shape[-1]
    c_out = w2_hwio.shape[-1]

    # Fold eval-mode BN scale into the conv weights (constant-size, outside the
    # kernel); cast matmul operands to bf16, keep the bias epilogue in f32.
    w1f = (w1_hwio * s1).reshape(9 * c_in, c_mid).astype(jnp.bfloat16)
    w2f = (w2_hwio * s2).reshape(9 * c_mid, c_out).astype(jnp.bfloat16)
    b1f = b1.reshape(1, c_mid).astype(jnp.float32)
    b2f = b2.reshape(1, c_out).astype(jnp.float32)

    # Single layout copy: crop to even size, NCHW -> (N, 4, hp, wp, C) windows.
    x = x_nchw[:, :, : 2 * hp, : 2 * wp]
    x = jnp.transpose(x, (0, 2, 3, 1))
    xw = x.reshape(n, hp, 2, wp, 2, c_in)
    xw = jnp.transpose(xw, (0, 2, 4, 1, 3, 5)).reshape(n, 4, hp, wp, c_in)

    out_flat = pl.pallas_call(
        _down_kernel,
        out_shape=jax.ShapeDtypeStruct((n, hp * wp, c_out), x_nchw.dtype),
        grid_spec=pltpu.PrefetchScalarGridSpec(
            num_scalar_prefetch=0,
            grid=(n,),
            in_specs=[
                pl.BlockSpec((1, 4, hp, wp, c_in), lambda i: (i, 0, 0, 0, 0)),
                pl.BlockSpec((9 * c_in, c_mid), lambda i: (0, 0)),
                pl.BlockSpec((1, c_mid), lambda i: (0, 0)),
                pl.BlockSpec((9 * c_mid, c_out), lambda i: (0, 0)),
                pl.BlockSpec((1, c_out), lambda i: (0, 0)),
            ],
            out_specs=pl.BlockSpec((1, hp * wp, c_out), lambda i: (i, 0, 0)),
            scratch_shapes=[
                pltpu.VMEM((hp + 2, wp + 2, c_in), jnp.bfloat16),
                pltpu.VMEM((hp + 2, wp + 2, c_mid), jnp.bfloat16),
                pltpu.VMEM((hp, wp, 9 * c_in), jnp.bfloat16),
                pltpu.VMEM((hp, wp, 9 * c_mid), jnp.bfloat16),
            ],
        ),
        compiler_params=pltpu.CompilerParams(
            dimension_semantics=("parallel",),
            vmem_limit_bytes=32 * 1024 * 1024,
        ),
    )(xw, w1f, b1f, w2f, b2f)

    return out_flat.reshape(n, hp, wp, c_out)


def init_params(key, c_in, c_out):
    """Deterministic synthetic parameters for Down(c_in, c_out)."""
    c_mid = c_out
    ks = jax.random.split(key, 10)
    eps = 1e-5
    w1 = jax.random.normal(ks[0], (3, 3, c_in, c_mid), jnp.float32) * 0.1   # HWIO
    w2 = jax.random.normal(ks[1], (3, 3, c_mid, c_out), jnp.float32) * 0.1  # HWIO
    g1 = jax.random.uniform(ks[2], (c_mid,), jnp.float32, 0.5, 1.5)
    beta1 = jax.random.normal(ks[3], (c_mid,), jnp.float32) * 0.1
    m1 = jax.random.normal(ks[4], (c_mid,), jnp.float32) * 0.1
    v1 = jax.random.uniform(ks[5], (c_mid,), jnp.float32, 0.5, 1.5)
    g2 = jax.random.uniform(ks[6], (c_out,), jnp.float32, 0.5, 1.5)
    beta2 = jax.random.normal(ks[7], (c_out,), jnp.float32) * 0.1
    m2 = jax.random.normal(ks[8], (c_out,), jnp.float32) * 0.1
    v2 = jax.random.uniform(ks[9], (c_out,), jnp.float32, 0.5, 1.5)
    s1 = g1 / jnp.sqrt(v1 + eps)
    b1 = beta1 - m1 * s1
    s2 = g2 / jnp.sqrt(v2 + eps)
    b2 = beta2 - m2 * s2
    return {"w1_hwio": w1, "w2_hwio": w2, "s1": s1, "b1": b1, "s2": s2, "b2": b2}


def ref_forward(x_nchw, params):
    """Plain-JAX f32 reference of the same forward pass (NHWC output)."""
    x = jnp.transpose(x_nchw, (0, 2, 3, 1))
    n, h, w, _ = x.shape
    x = x[:, : (h // 2) * 2, : (w // 2) * 2, :]
    p = lax.reduce_window(x, -jnp.inf, lax.max, (1, 2, 2, 1), (1, 2, 2, 1), "VALID")
    dn = ("NHWC", "HWIO", "NHWC")
    y = lax.conv_general_dilated(p, params["w1_hwio"], (1, 1), "SAME",
                                 dimension_numbers=dn)
    y = jnp.maximum(y * params["s1"] + params["b1"], 0.0)
    z = lax.conv_general_dilated(y, params["w2_hwio"], (1, 1), "SAME",
                                 dimension_numbers=dn)
    z = jnp.maximum(z * params["s2"] + params["b2"], 0.0)
    return z


if __name__ == "__main__":
    key = jax.random.PRNGKey(0)
    k_x, k_p = jax.random.split(key)

    N, C_IN, H, W = 2, 4, 16, 16
    C_OUT = 8

    x = jax.random.normal(k_x, (N, C_IN, H, W), jnp.float32)  # NCHW, like PyTorch
    params = init_params(k_p, C_IN, C_OUT)

    out = down_forward(x, params)          # NHWC: (2, 8, 8, 8)
    out = jax.block_until_ready(out)

    ref = ref_forward(x, params)
    assert out.shape == (N, H // 2, W // 2, C_OUT), out.shape
    # bf16 MXU operands / bf16 intermediate vs f32 reference -> looser tolerance.
    assert jnp.allclose(out, ref, atol=5e-2, rtol=5e-2), (
        f"max abs err {jnp.max(jnp.abs(out - ref))}")

    print("KERNEL_OK")
</pallas_src>

<mosaic_0001>
module attributes {stable_mosaic.version = 11 : i64} {
  func.func @_down_kernel(%arg0: i32, %arg1: memref<1x4x8x8x4xf32, #tpu.memory_space<vmem>>, %arg2: memref<36x8xbf16, #tpu.memory_space<vmem>>, %arg3: memref<1x8xf32, #tpu.memory_space<vmem>>, %arg4: memref<72x8xbf16, #tpu.memory_space<vmem>>, %arg5: memref<1x8xf32, #tpu.memory_space<vmem>>, %arg6: memref<1x64x8xf32, #tpu.memory_space<vmem>>, %arg7: memref<10x10x4xbf16, #tpu.memory_space<vmem>>, %arg8: memref<10x10x8xbf16, #tpu.memory_space<vmem>>, %arg9: memref<8x8x36xbf16, #tpu.memory_space<vmem>>, %arg10: memref<8x8x72xbf16, #tpu.memory_space<vmem>>) attributes {dimension_semantics = [#tpu.dimension_semantics<parallel>], iteration_bounds = array<i64: 2>, scalar_prefetch = 0 : i64, scratch_operands = 4 : i64, tpu.core_type = #tpu.core_type<tc>, window_params = [{transform_indices = @transform_0, window_bounds = array<i64: 1, 4, 8, 8, 4>}, {pipeline_mode = #tpu.pipeline_mode<synchronous>, transform_indices = @transform_1, window_bounds = array<i64: 36, 8>}, {pipeline_mode = #tpu.pipeline_mode<synchronous>, transform_indices = @transform_2, window_bounds = array<i64: 1, 8>}, {pipeline_mode = #tpu.pipeline_mode<synchronous>, transform_indices = @transform_3, window_bounds = array<i64: 72, 8>}, {pipeline_mode = #tpu.pipeline_mode<synchronous>, transform_indices = @transform_4, window_bounds = array<i64: 1, 8>}, {transform_indices = @transform_5, window_bounds = array<i64: 1, 64, 8>}]} {
    %cst = arith.constant 0.000000e+00 : bf16
    %0 = vector.broadcast %cst : bf16 to vector<1x10x4xbf16>
    %c0 = arith.constant 0 : index
    %c0_0 = arith.constant 0 : index
    %c0_1 = arith.constant 0 : index
    %1 = vector.load %arg7[%c0, %c0_0, %c0_1] : memref<10x10x4xbf16, #tpu.memory_space<vmem>>, vector<1x10x4xbf16>
    tpu.vector_store %arg7[%c0, %c0_0, %c0_1], %0 {strides = array<i32>} : memref<10x10x4xbf16, #tpu.memory_space<vmem>>, vector<1x10x4xbf16>,
    %c9 = arith.constant 9 : index
    %c0_2 = arith.constant 0 : index
    %c0_3 = arith.constant 0 : index
    %2 = vector.load %arg7[%c9, %c0_2, %c0_3] : memref<10x10x4xbf16, #tpu.memory_space<vmem>>, vector<1x10x4xbf16>
    tpu.vector_store %arg7[%c9, %c0_2, %c0_3], %0 {strides = array<i32>} : memref<10x10x4xbf16, #tpu.memory_space<vmem>>, vector<1x10x4xbf16>,
    %cst_4 = arith.constant 0.000000e+00 : bf16
    %3 = vector.broadcast %cst_4 : bf16 to vector<8x1x4xbf16>
    %c1 = arith.constant 1 : index
    %c0_5 = arith.constant 0 : index
    %c0_6 = arith.constant 0 : index
    %4 = vector.load %arg7[%c1, %c0_5, %c0_6] : memref<10x10x4xbf16, #tpu.memory_space<vmem>>, vector<8x1x4xbf16>
    tpu.vector_store %arg7[%c1, %c0_5, %c0_6], %3 {strides = array<i32>} : memref<10x10x4xbf16, #tpu.memory_space<vmem>>, vector<8x1x4xbf16>,
    %c1_7 = arith.constant 1 : index
    %c9_8 = arith.constant 9 : index
    %c0_9 = arith.constant 0 : index
    %5 = vector.load %arg7[%c1_7, %c9_8, %c0_9] : memref<10x10x4xbf16, #tpu.memory_space<vmem>>, vector<8x1x4xbf16>
    tpu.vector_store %arg7[%c1_7, %c9_8, %c0_9], %3 {strides = array<i32>} : memref<10x10x4xbf16, #tpu.memory_space<vmem>>, vector<8x1x4xbf16>,
    %cst_10 = arith.constant 0.000000e+00 : bf16
    %6 = vector.broadcast %cst_10 : bf16 to vector<1x10x8xbf16>
    %c0_11 = arith.constant 0 : index
    %c0_12 = arith.constant 0 : index
    %c0_13 = arith.constant 0 : index
    %7 = vector.load %arg8[%c0_11, %c0_12, %c0_13] : memref<10x10x8xbf16, #tpu.memory_space<vmem>>, vector<1x10x8xbf16>
    tpu.vector_store %arg8[%c0_11, %c0_12, %c0_13], %6 {strides = array<i32>} : memref<10x10x8xbf16, #tpu.memory_space<vmem>>, vector<1x10x8xbf16>,
    %c9_14 = arith.constant 9 : index
    %c0_15 = arith.constant 0 : index
    %c0_16 = arith.constant 0 : index
    %8 = vector.load %arg8[%c9_14, %c0_15, %c0_16] : memref<10x10x8xbf16, #tpu.memory_space<vmem>>, vector<1x10x8xbf16>
    tpu.vector_store %arg8[%c9_14, %c0_15, %c0_16], %6 {strides = array<i32>} : memref<10x10x8xbf16, #tpu.memory_space<vmem>>, vector<1x10x8xbf16>,
    %cst_17 = arith.constant 0.000000e+00 : bf16
    %9 = vector.broadcast %cst_17 : bf16 to vector<8x1x8xbf16>
    %c1_18 = arith.constant 1 : index
    %c0_19 = arith.constant 0 : index
    %c0_20 = arith.constant 0 : index
    %10 = vector.load %arg8[%c1_18, %c0_19, %c0_20] : memref<10x10x8xbf16, #tpu.memory_space<vmem>>, vector<8x1x8xbf16>
    tpu.vector_store %arg8[%c1_18, %c0_19, %c0_20], %9 {strides = array<i32>} : memref<10x10x8xbf16, #tpu.memory_space<vmem>>, vector<8x1x8xbf16>,
    %c1_21 = arith.constant 1 : index
    %c9_22 = arith.constant 9 : index
    %c0_23 = arith.constant 0 : index
    %11 = vector.load %arg8[%c1_21, %c9_22, %c0_23] : memref<10x10x8xbf16, #tpu.memory_space<vmem>>, vector<8x1x8xbf16>
    tpu.vector_store %arg8[%c1_21, %c9_22, %c0_23], %9 {strides = array<i32>} : memref<10x10x8xbf16, #tpu.memory_space<vmem>>, vector<8x1x8xbf16>,
    %c0_24 = arith.constant 0 : index
    %c0_25 = arith.constant 0 : index
    %c0_26 = arith.constant 0 : index
    %c0_27 = arith.constant 0 : index
    %c0_28 = arith.constant 0 : index
    %12 = vector.load %arg1[%c0_24, %c0_25, %c0_26, %c0_27, %c0_28] : memref<1x4x8x8x4xf32, #tpu.memory_space<vmem>>, vector<1x1x8x8x4xf32>
    %13 = vector.shape_cast %12 : vector<1x1x8x8x4xf32> to vector<8x8x4xf32>
    %c0_29 = arith.constant 0 : index
    %c1_30 = arith.constant 1 : index
    %c0_31 = arith.constant 0 : index
    %c0_32 = arith.constant 0 : index
    %c0_33 = arith.constant 0 : index
    %14 = vector.load %arg1[%c0_29, %c1_30, %c0_31, %c0_32, %c0_33] : memref<1x4x8x8x4xf32, #tpu.memory_space<vmem>>, vector<1x1x8x8x4xf32>
    %15 = vector.shape_cast %14 : vector<1x1x8x8x4xf32> to vector<8x8x4xf32>
    %16 = arith.maximumf %13, %15 : vector<8x8x4xf32>
    %c0_34 = arith.constant 0 : index
    %c2 = arith.constant 2 : index
    %c0_35 = arith.constant 0 : index
    %c0_36 = arith.constant 0 : index
    %c0_37 = arith.constant 0 : index
    %17 = vector.load %arg1[%c0_34, %c2, %c0_35, %c0_36, %c0_37] : memref<1x4x8x8x4xf32, #tpu.memory_space<vmem>>, vector<1x1x8x8x4xf32>
    %18 = vector.shape_cast %17 : vector<1x1x8x8x4xf32> to vector<8x8x4xf32>
    %c0_38 = arith.constant 0 : index
    %c3 = arith.constant 3 : index
    %c0_39 = arith.constant 0 : index
    %c0_40 = arith.constant 0 : index
    %c0_41 = arith.constant 0 : index
    %19 = vector.load %arg1[%c0_38, %c3, %c0_39, %c0_40, %c0_41] : memref<1x4x8x8x4xf32, #tpu.memory_space<vmem>>, vector<1x1x8x8x4xf32>
    %20 = vector.shape_cast %19 : vector<1x1x8x8x4xf32> to vector<8x8x4xf32>
    %21 = arith.maximumf %18, %20 : vector<8x8x4xf32>
    %22 = arith.maximumf %16, %21 : vector<8x8x4xf32>
    %23 = arith.truncf %22 : vector<8x8x4xf32> to vector<8x8x4xbf16>
    %c1_42 = arith.constant 1 : index
    %c1_43 = arith.constant 1 : index
    %c0_44 = arith.constant 0 : index
    %24 = vector.load %arg7[%c1_42, %c1_43, %c0_44] : memref<10x10x4xbf16, #tpu.memory_space<vmem>>, vector<8x8x4xbf16>
    tpu.vector_store %arg7[%c1_42, %c1_43, %c0_44], %23 {strides = array<i32>} : memref<10x10x4xbf16, #tpu.memory_space<vmem>>, vector<8x8x4xbf16>,
    %c0_45 = arith.constant 0 : index
    %c0_46 = arith.constant 0 : index
    %c0_47 = arith.constant 0 : index
    %25 = vector.load %arg7[%c0_45, %c0_46, %c0_47] : memref<10x10x4xbf16, #tpu.memory_space<vmem>>, vector<8x8x4xbf16>
    %c0_48 = arith.constant 0 : index
    %c0_49 = arith.constant 0 : index
    %c0_50 = arith.constant 0 : index
    %26 = vector.load %arg9[%c0_48, %c0_49, %c0_50] : memref<8x8x36xbf16, #tpu.memory_space<vmem>>, vector<8x8x4xbf16>
    tpu.vector_store %arg9[%c0_48, %c0_49, %c0_50], %25 {strides = array<i32>} : memref<8x8x36xbf16, #tpu.memory_space<vmem>>, vector<8x8x4xbf16>,
    %c0_51 = arith.constant 0 : index
    %c1_52 = arith.constant 1 : index
    %c0_53 = arith.constant 0 : index
    %27 = vector.load %arg7[%c0_51, %c1_52, %c0_53] : memref<10x10x4xbf16, #tpu.memory_space<vmem>>, vector<8x8x4xbf16>
    %c0_54 = arith.constant 0 : index
    %c0_55 = arith.constant 0 : index
    %c4 = arith.constant 4 : index
    %28 = vector.load %arg9[%c0_54, %c0_55, %c4] : memref<8x8x36xbf16, #tpu.memory_space<vmem>>, vector<8x8x4xbf16>
    tpu.vector_store %arg9[%c0_54, %c0_55, %c4], %27 {strides = array<i32>} : memref<8x8x36xbf16, #tpu.memory_space<vmem>>, vector<8x8x4xbf16>,
    %c0_56 = arith.constant 0 : index
    %c2_57 = arith.constant 2 : index
    %c0_58 = arith.constant 0 : index
    %29 = vector.load %arg7[%c0_56, %c2_57, %c0_58] : memref<10x10x4xbf16, #tpu.memory_space<vmem>>, vector<8x8x4xbf16>
    %c0_59 = arith.constant 0 : index
    %c0_60 = arith.constant 0 : index
    %c8 = arith.constant 8 : index
    %30 = vector.load %arg9[%c0_59, %c0_60, %c8] : memref<8x8x36xbf16, #tpu.memory_space<vmem>>, vector<8x8x4xbf16>
    tpu.vector_store %arg9[%c0_59, %c0_60, %c8], %29 {strides = array<i32>} : memref<8x8x36xbf16, #tpu.memory_space<vmem>>, vector<8x8x4xbf16>,
    %c1_61 = arith.constant 1 : index
    %c0_62 = arith.constant 0 : index
    %c0_63 = arith.constant 0 : index
    %31 = vector.load %arg7[%c1_61, %c0_62, %c0_63] : memref<10x10x4xbf16, #tpu.memory_space<vmem>>, vector<8x8x4xbf16>
    %c0_64 = arith.constant 0 : index
    %c0_65 = arith.constant 0 : index
    %c12 = arith.constant 12 : index
    %32 = vector.load %arg9[%c0_64, %c0_65, %c12] : memref<8x8x36xbf16, #tpu.memory_space<vmem>>, vector<8x8x4xbf16>
    tpu.vector_store %arg9[%c0_64, %c0_65, %c12], %31 {strides = array<i32>} : memref<8x8x36xbf16, #tpu.memory_space<vmem>>, vector<8x8x4xbf16>,
    %c1_66 = arith.constant 1 : index
    %c1_67 = arith.constant 1 : index
    %c0_68 = arith.constant 0 : index
    %33 = vector.load %arg7[%c1_66, %c1_67, %c0_68] : memref<10x10x4xbf16, #tpu.memory_space<vmem>>, vector<8x8x4xbf16>
    %c0_69 = arith.constant 0 : index
    %c0_70 = arith.constant 0 : index
    %c16 = arith.constant 16 : index
    %34 = vector.load %arg9[%c0_69, %c0_70, %c16] : memref<8x8x36xbf16, #tpu.memory_space<vmem>>, vector<8x8x4xbf16>
    tpu.vector_store %arg9[%c0_69, %c0_70, %c16], %33 {strides = array<i32>} : memref<8x8x36xbf16, #tpu.memory_space<vmem>>, vector<8x8x4xbf16>,
    %c1_71 = arith.constant 1 : index
    %c2_72 = arith.constant 2 : index
    %c0_73 = arith.constant 0 : index
    %35 = vector.load %arg7[%c1_71, %c2_72, %c0_73] : memref<10x10x4xbf16, #tpu.memory_space<vmem>>, vector<8x8x4xbf16>
    %c0_74 = arith.constant 0 : index
    %c0_75 = arith.constant 0 : index
    %c20 = arith.constant 20 : index
    %36 = vector.load %arg9[%c0_74, %c0_75, %c20] : memref<8x8x36xbf16, #tpu.memory_space<vmem>>, vector<8x8x4xbf16>
    tpu.vector_store %arg9[%c0_74, %c0_75, %c20], %35 {strides = array<i32>} : memref<8x8x36xbf16, #tpu.memory_space<vmem>>, vector<8x8x4xbf16>,
    %c2_76 = arith.constant 2 : index
    %c0_77 = arith.constant 0 : index
    %c0_78 = arith.constant 0 : index
    %37 = vector.load %arg7[%c2_76, %c0_77, %c0_78] : memref<10x10x4xbf16, #tpu.memory_space<vmem>>, vector<8x8x4xbf16>
    %c0_79 = arith.constant 0 : index
    %c0_80 = arith.constant 0 : index
    %c24 = arith.constant 24 : index
    %38 = vector.load %arg9[%c0_79, %c0_80, %c24] : memref<8x8x36xbf16, #tpu.memory_space<vmem>>, vector<8x8x4xbf16>
    tpu.vector_store %arg9[%c0_79, %c0_80, %c24], %37 {strides = array<i32>} : memref<8x8x36xbf16, #tpu.memory_space<vmem>>, vector<8x8x4xbf16>,
    %c2_81 = arith.constant 2 : index
    %c1_82 = arith.constant 1 : index
    %c0_83 = arith.constant 0 : index
    %39 = vector.load %arg7[%c2_81, %c1_82, %c0_83] : memref<10x10x4xbf16, #tpu.memory_space<vmem>>, vector<8x8x4xbf16>
    %c0_84 = arith.constant 0 : index
    %c0_85 = arith.constant 0 : index
    %c28 = arith.constant 28 : index
    %40 = vector.load %arg9[%c0_84, %c0_85, %c28] : memref<8x8x36xbf16, #tpu.memory_space<vmem>>, vector<8x8x4xbf16>
    tpu.vector_store %arg9[%c0_84, %c0_85, %c28], %39 {strides = array<i32>} : memref<8x8x36xbf16, #tpu.memory_space<vmem>>, vector<8x8x4xbf16>,
    %c2_86 = arith.constant 2 : index
    %c2_87 = arith.constant 2 : index
    %c0_88 = arith.constant 0 : index
    %41 = vector.load %arg7[%c2_86, %c2_87, %c0_88] : memref<10x10x4xbf16, #tpu.memory_space<vmem>>, vector<8x8x4xbf16>
    %c0_89 = arith.constant 0 : index
    %c0_90 = arith.constant 0 : index
    %c32 = arith.constant 32 : index
    %42 = vector.load %arg9[%c0_89, %c0_90, %c32] : memref<8x8x36xbf16, #tpu.memory_space<vmem>>, vector<8x8x4xbf16>
    tpu.vector_store %arg9[%c0_89, %c0_90, %c32], %41 {strides = array<i32>} : memref<8x8x36xbf16, #tpu.memory_space<vmem>>, vector<8x8x4xbf16>,
    %c0_91 = arith.constant 0 : index
    %c0_92 = arith.constant 0 : index
    %c0_93 = arith.constant 0 : index
    %43 = vector.load %arg9[%c0_91, %c0_92, %c0_93] : memref<8x8x36xbf16, #tpu.memory_space<vmem>>, vector<8x8x36xbf16>
    %44 = vector.shape_cast %43 : vector<8x8x36xbf16> to vector<64x36xbf16>
    %c0_94 = arith.constant 0 : index
    %c0_95 = arith.constant 0 : index
    %45 = vector.load %arg2[%c0_94, %c0_95] : memref<36x8xbf16, #tpu.memory_space<vmem>>, vector<36x8xbf16>
    %cst_96 = arith.constant dense<0.000000e+00> : vector<64x8xf32>
    %46 = tpu.matmul %44, %45, %cst_96 {dimension_numbers = #tpu.dot_dimension_numbers<[1], [0], [0], [1], [0, 0, 1, 1], [], []>} : vector<64x36xbf16>, vector<36x8xbf16>, vector<64x8xf32> -> vector<64x8xf32>
    %c0_97 = arith.constant 0 : index
    %c0_98 = arith.constant 0 : index
    %47 = vector.load %arg3[%c0_97, %c0_98] : memref<1x8xf32, #tpu.memory_space<vmem>>, vector<1x8xf32>
    %48 = vector.broadcast %47 : vector<1x8xf32> to vector<64x8xf32>
    %49 = arith.addf %46, %48 : vector<64x8xf32>
    %cst_99 = arith.constant 0.000000e+00 : f32
    %50 = vector.broadcast %cst_99 : f32 to vector<64x8xf32>
    %51 = arith.maximumf %49, %50 : vector<64x8xf32>
    %52 = vector.shape_cast %51 : vector<64x8xf32> to vector<8x8x8xf32>
    %53 = arith.truncf %52 : vector<8x8x8xf32> to vector<8x8x8xbf16>
    %c1_100 = arith.constant 1 : index
    %c1_101 = arith.constant 1 : index
    %c0_102 = arith.constant 0 : index
    %54 = vector.load %arg8[%c1_100, %c1_101, %c0_102] : memref<10x10x8xbf16, #tpu.memory_space<vmem>>, vector<8x8x8xbf16>
    tpu.vector_store %arg8[%c1_100, %c1_101, %c0_102], %53 {strides = array<i32>} : memref<10x10x8xbf16, #tpu.memory_space<vmem>>, vector<8x8x8xbf16>,
    %c0_103 = arith.constant 0 : index
    %c0_104 = arith.constant 0 : index
    %c0_105 = arith.constant 0 : index
    %55 = vector.load %arg8[%c0_103, %c0_104, %c0_105] : memref<10x10x8xbf16, #tpu.memory_space<vmem>>, vector<8x8x8xbf16>
    %c0_106 = arith.constant 0 : index
    %c0_107 = arith.constant 0 : index
    %c0_108 = arith.constant 0 : index
    %56 = vector.load %arg10[%c0_106, %c0_107, %c0_108] : memref<8x8x72xbf16, #tpu.memory_space<vmem>>, vector<8x8x8xbf16>
    tpu.vector_store %arg10[%c0_106, %c0_107, %c0_108], %55 {strides = array<i32>} : memref<8x8x72xbf16, #tpu.memory_space<vmem>>, vector<8x8x8xbf16>,
    %c0_109 = arith.constant 0 : index
    %c1_110 = arith.constant 1 : index
    %c0_111 = arith.constant 0 : index
    %57 = vector.load %arg8[%c0_109, %c1_110, %c0_111] : memref<10x10x8xbf16, #tpu.memory_space<vmem>>, vector<8x8x8xbf16>
    %c0_112 = arith.constant 0 : index
    %c0_113 = arith.constant 0 : index
    %c8_114 = arith.constant 8 : index
    %58 = vector.load %arg10[%c0_112, %c0_113, %c8_114] : memref<8x8x72xbf16, #tpu.memory_space<vmem>>, vector<8x8x8xbf16>
    tpu.vector_store %arg10[%c0_112, %c0_113, %c8_114], %57 {strides = array<i32>} : memref<8x8x72xbf16, #tpu.memory_space<vmem>>, vector<8x8x8xbf16>,
    %c0_115 = arith.constant 0 : index
    %c2_116 = arith.constant 2 : index
    %c0_117 = arith.constant 0 : index
    %59 = vector.load %arg8[%c0_115, %c2_116, %c0_117] : memref<10x10x8xbf16, #tpu.memory_space<vmem>>, vector<8x8x8xbf16>
    %c0_118 = arith.constant 0 : index
    %c0_119 = arith.constant 0 : index
    %c16_120 = arith.constant 16 : index
    %60 = vector.load %arg10[%c0_118, %c0_119, %c16_120] : memref<8x8x72xbf16, #tpu.memory_space<vmem>>, vector<8x8x8xbf16>
    tpu.vector_store %arg10[%c0_118, %c0_119, %c16_120], %59 {strides = array<i32>} : memref<8x8x72xbf16, #tpu.memory_space<vmem>>, vector<8x8x8xbf16>,
    %c1_121 = arith.constant 1 : index
    %c0_122 = arith.constant 0 : index
    %c0_123 = arith.constant 0 : index
    %61 = vector.load %arg8[%c1_121, %c0_122, %c0_123] : memref<10x10x8xbf16, #tpu.memory_space<vmem>>, vector<8x8x8xbf16>
    %c0_124 = arith.constant 0 : index
    %c0_125 = arith.constant 0 : index
    %c24_126 = arith.constant 24 : index
    %62 = vector.load %arg10[%c0_124, %c0_125, %c24_126] : memref<8x8x72xbf16, #tpu.memory_space<vmem>>, vector<8x8x8xbf16>
    tpu.vector_store %arg10[%c0_124, %c0_125, %c24_126], %61 {strides = array<i32>} : memref<8x8x72xbf16, #tpu.memory_space<vmem>>, vector<8x8x8xbf16>,
    %c1_127 = arith.constant 1 : index
    %c1_128 = arith.constant 1 : index
    %c0_129 = arith.constant 0 : index
    %63 = vector.load %arg8[%c1_127, %c1_128, %c0_129] : memref<10x10x8xbf16, #tpu.memory_space<vmem>>, vector<8x8x8xbf16>
    %c0_130 = arith.constant 0 : index
    %c0_131 = arith.constant 0 : index
    %c32_132 = arith.constant 32 : index
    %64 = vector.load %arg10[%c0_130, %c0_131, %c32_132] : memref<8x8x72xbf16, #tpu.memory_space<vmem>>, vector<8x8x8xbf16>
    tpu.vector_store %arg10[%c0_130, %c0_131, %c32_132], %63 {strides = array<i32>} : memref<8x8x72xbf16, #tpu.memory_space<vmem>>, vector<8x8x8xbf16>,
    %c1_133 = arith.constant 1 : index
    %c2_134 = arith.constant 2 : index
    %c0_135 = arith.constant 0 : index
    %65 = vector.load %arg8[%c1_133, %c2_134, %c0_135] : memref<10x10x8xbf16, #tpu.memory_space<vmem>>, vector<8x8x8xbf16>
    %c0_136 = arith.constant 0 : index
    %c0_137 = arith.constant 0 : index
    %c40 = arith.constant 40 : index
    %66 = vector.load %arg10[%c0_136, %c0_137, %c40] : memref<8x8x72xbf16, #tpu.memory_space<vmem>>, vector<8x8x8xbf16>
    tpu.vector_store %arg10[%c0_136, %c0_137, %c40], %65 {strides = array<i32>} : memref<8x8x72xbf16, #tpu.memory_space<vmem>>, vector<8x8x8xbf16>,
    %c2_138 = arith.constant 2 : index
    %c0_139 = arith.constant 0 : index
    %c0_140 = arith.constant 0 : index
    %67 = vector.load %arg8[%c2_138, %c0_139, %c0_140] : memref<10x10x8xbf16, #tpu.memory_space<vmem>>, vector<8x8x8xbf16>
    %c0_141 = arith.constant 0 : index
    %c0_142 = arith.constant 0 : index
    %c48 = arith.constant 48 : index
    %68 = vector.load %arg10[%c0_141, %c0_142, %c48] : memref<8x8x72xbf16, #tpu.memory_space<vmem>>, vector<8x8x8xbf16>
    tpu.vector_store %arg10[%c0_141, %c0_142, %c48], %67 {strides = array<i32>} : memref<8x8x72xbf16, #tpu.memory_space<vmem>>, vector<8x8x8xbf16>,
    %c2_143 = arith.constant 2 : index
    %c1_144 = arith.constant 1 : index
    %c0_145 = arith.constant 0 : index
    %69 = vector.load %arg8[%c2_143, %c1_144, %c0_145] : memref<10x10x8xbf16, #tpu.memory_space<vmem>>, vector<8x8x8xbf16>
    %c0_146 = arith.constant 0 : index
    %c0_147 = arith.constant 0 : index
    %c56 = arith.constant 56 : index
    %70 = vector.load %arg10[%c0_146, %c0_147, %c56] : memref<8x8x72xbf16, #tpu.memory_space<vmem>>, vector<8x8x8xbf16>
    tpu.vector_store %arg10[%c0_146, %c0_147, %c56], %69 {strides = array<i32>} : memref<8x8x72xbf16, #tpu.memory_space<vmem>>, vector<8x8x8xbf16>,
    %c2_148 = arith.constant 2 : index
    %c2_149 = arith.constant 2 : index
    %c0_150 = arith.constant 0 : index
    %71 = vector.load %arg8[%c2_148, %c2_149, %c0_150] : memref<10x10x8xbf16, #tpu.memory_space<vmem>>, vector<8x8x8xbf16>
    %c0_151 = arith.constant 0 : index
    %c0_152 = arith.constant 0 : index
    %c64 = arith.constant 64 : index
    %72 = vector.load %arg10[%c0_151, %c0_152, %c64] : memref<8x8x72xbf16, #tpu.memory_space<vmem>>, vector<8x8x8xbf16>
    tpu.vector_store %arg10[%c0_151, %c0_152, %c64], %71 {strides = array<i32>} : memref<8x8x72xbf16, #tpu.memory_space<vmem>>, vector<8x8x8xbf16>,
    %c0_153 = arith.constant 0 : index
    %c0_154 = arith.constant 0 : index
    %c0_155 = arith.constant 0 : index
    %73 = vector.load %arg10[%c0_153, %c0_154, %c0_155] : memref<8x8x72xbf16, #tpu.memory_space<vmem>>, vector<8x8x72xbf16>
    %74 = vector.shape_cast %73 : vector<8x8x72xbf16> to vector<64x72xbf16>
    %c0_156 = arith.constant 0 : index
    %c0_157 = arith.constant 0 : index
    %75 = vector.load %arg4[%c0_156, %c0_157] : memref<72x8xbf16, #tpu.memory_space<vmem>>, vector<72x8xbf16>
    %cst_158 = arith.constant dense<0.000000e+00> : vector<64x8xf32>
    %76 = tpu.matmul %74, %75, %cst_158 {dimension_numbers = #tpu.dot_dimension_numbers<[1], [0], [0], [1], [0, 0, 1, 1], [], []>} : vector<64x72xbf16>, vector<72x8xbf16>, vector<64x8xf32> -> vector<64x8xf32>
    %c0_159 = arith.constant 0 : index
    %c0_160 = arith.constant 0 : index
    %77 = vector.load %arg5[%c0_159, %c0_160] : memref<1x8xf32, #tpu.memory_space<vmem>>, vector<1x8xf32>
    %78 = vector.broadcast %77 : vector<1x8xf32> to vector<64x8xf32>
    %79 = arith.addf %76, %78 : vector<64x8xf32>
    %cst_161 = arith.constant 0.000000e+00 : f32
    %80 = vector.broadcast %cst_161 : f32 to vector<64x8xf32>
    %81 = arith.maximumf %79, %80 : vector<64x8xf32>
    %c0_162 = arith.constant 0 : index
    %c0_163 = arith.constant 0 : index
    %c0_164 = arith.constant 0 : index
    %82 = vector.load %arg6[%c0_162, %c0_163, %c0_164] : memref<1x64x8xf32, #tpu.memory_space<vmem>>, vector<1x64x8xf32>
    %83 = vector.shape_cast %82 : vector<1x64x8xf32> to vector<64x8xf32>
    %84 = vector.shape_cast %81 : vector<64x8xf32> to vector<1x64x8xf32>
    tpu.vector_store %arg6[%c0_162, %c0_163, %c0_164], %84 {strides = array<i32>} : memref<1x64x8xf32, #tpu.memory_space<vmem>>, vector<1x64x8xf32>,
    return
  }
  func.func @transform_0(%arg0: i32) -> (i32, i32, i32, i32, i32) {
    %c0_i32 = arith.constant 0 : i32
    %c0_i32_0 = arith.constant 0 : i32
    %c0_i32_1 = arith.constant 0 : i32
    %c0_i32_2 = arith.constant 0 : i32
    %c0_i32_3 = arith.constant 0 : i32
    return %arg0, %c0_i32, %c0_i32_0, %c0_i32_1, %c0_i32_2 : i32, i32, i32, i32, i32
  }
  func.func @transform_1(%arg0: i32) -> (i32, i32) {
    %c0_i32 = arith.constant 0 : i32
    %c0_i32_0 = arith.constant 0 : i32
    %c0_i32_1 = arith.constant 0 : i32
    return %c0_i32, %c0_i32_0 : i32, i32
  }
  func.func @transform_2(%arg0: i32) -> (i32, i32) {
    %c0_i32 = arith.constant 0 : i32
    %c0_i32_0 = arith.constant 0 : i32
    %c0_i32_1 = arith.constant 0 : i32
    return %c0_i32, %c0_i32_0 : i32, i32
  }
  func.func @transform_3(%arg0: i32) -> (i32, i32) {
    %c0_i32 = arith.constant 0 : i32
    %c0_i32_0 = arith.constant 0 : i32
    %c0_i32_1 = arith.constant 0 : i32
    return %c0_i32, %c0_i32_0 : i32, i32
  }
  func.func @transform_4(%arg0: i32) -> (i32, i32) {
    %c0_i32 = arith.constant 0 : i32
    %c0_i32_0 = arith.constant 0 : i32
    %c0_i32_1 = arith.constant 0 : i32
    return %c0_i32, %c0_i32_0 : i32, i32
  }
  func.func @transform_5(%arg0: i32) -> (i32, i32, i32) {
    %c0_i32 = arith.constant 0 : i32
    %c0_i32_0 = arith.constant 0 : i32
    %c0_i32_1 = arith.constant 0 : i32
    return %arg0, %c0_i32, %c0_i32_0 : i32, i32, i32
  }
}

</mosaic_0001>

<llo_original>
// kernel: tpu_custom_call.1
$region0: #{tpu_custom_call.1}
  #allocation0 [shape = 'u32[]', space=smem, size = 0x4, offset = 0x4, fixed_abs, tag = 'smem constant byte address 0x4 - core index']
  #allocation1 [shape = 'u32[144,128]{1,0:T(1,128)}', space=vmem, size = 0x12000, scoped, tag = 'internal scratch']
  #allocation2 [shape = 'bf16[10,10,4]{2,1,0:T(8,128)(2,1)}', space=vmem, size = 0xa000, scoped, tag = 'scratch operand']
  #allocation3 [shape = 'bf16[10,10,8]{2,1,0:T(8,128)(2,1)}', space=vmem, size = 0xa000, scoped, tag = 'scratch operand']
  #allocation4 [shape = 'bf16[8,8,36]{2,1,0:T(8,128)(2,1)}', space=vmem, size = 0x4000, scoped, tag = 'scratch operand']
  #allocation5 [shape = 'bf16[8,8,72]{2,1,0:T(8,128)(2,1)}', space=vmem, size = 0x4000, scoped, tag = 'scratch operand']
  %s0 = inlined_call_operand.vmem [shape: f32[2,4,8,8,4], index: 0, kind: input, shape index: {}]
  %s1 = inlined_call_operand.vmem [shape: bf16[36,8], index: 1, kind: input, shape index: {}]
  %s2 = inlined_call_operand.vmem [shape: f32[1,8], index: 2, kind: input, shape index: {}]
  %s3 = inlined_call_operand.vmem [shape: bf16[72,8], index: 3, kind: input, shape index: {}]
  %s4 = inlined_call_operand.vmem [shape: f32[1,8], index: 4, kind: input, shape index: {}]
  %s5 = inlined_call_operand.vmem [shape: f32[2,64,8], index: 5, kind: output, shape index: {}]
  %s6 = sld [smem:[#allocation0]]
  $region53: #{tpu_custom_call.1} parent=0
    _
  %s8 = ssub.s32 1, %s6
  %s9 = scalar_select 0, %s8, %s6
  loop: start=0, step=1, limit=4
  $region2: #{tpu_custom_call.1} parent=0 // loop_pre_header
    _
  $region3: #{tpu_custom_call.1} parent=0 // loop_header
    %s11 = sphi 0, %s15
    %p12 = scmp.ge.s32.totalorder %s11, 4
    %s21 = sphi 0, %s23
    %s24 = sphi 0, %s21
    %s25 = sphi 0, %s24
    %s41 = sphi 0, %s25
    %s45 = sphi 0, %s45
    %s47 = sphi 0, %s45
    %s48 = sphi 0, %s47
    %s62 = sphi 0, %s48
    %s66 = sphi 0, %s66
    %s68 = sphi 0, %s66
    %s69 = sphi 0, %s68
    %s83 = sphi 0, %s69
    %s87 = sphi 0, %s87
    %s89 = sphi 0, %s87
    %s90 = sphi 0, %s89
    %s104 = sphi 0, %s90
    %s108 = sphi 0, %s108
    %s110 = sphi 0, %s108
    %s111 = sphi 0, %s110
    %s125 = sphi 0, %s111
    %s131 = sphi 0, %s133
    %s134 = sphi 0, %s131
    %s135 = sphi 0, %s134
    %s151 = sphi 0, %s135
  $region4: #{tpu_custom_call.1} parent=0 // loop_header_branch
    %14 = sbr.rel (%p12) target = $region8
  $region5: #{tpu_custom_call.1} parent=0 // loop_body
    %s16 = ssub.s32 %s11, 1
    %s17 = ssub.s32 %s11, 2
    %s18 = sadd.s32 %s11, 1
    %s19 = ssub.s32 %s11, %s18
    %p20 = scmp.eq.s32.totalorder %s19, 0
    %s22 = sadd.s32 %s21, 1
    %s23 = scalar_select %p20, %s21, %s22
    %p26 = pneg %p20
    %p27 = scmp.eq.s32.totalorder %s11, 1
    %p28 = por %p26, %p27
    %p29 = scmp.ne.s32.totalorder %s21, %s24
    %p30 = scmp.eq.s32.totalorder %s11, 0
    %p31 = por %p29, %p30
    %p32 = scmp.ne.s32.totalorder %s21, %s24
    %p33 = scmp.eq.s32.totalorder %s16, 1
    %p34 = por %p32, %p33
    %p35 = scmp.ne.s32.totalorder %s24, %s25
    %p36 = scmp.eq.s32.totalorder %s16, 0
    %p37 = por %p35, %p36
    %p38 = scmp.ne.s32.totalorder %s24, %s25
    %p39 = scmp.eq.s32.totalorder %s17, 1
    %p40 = por %p38, %p39
    %p42 = scmp.ne.s32.totalorder %s25, %s41
    %p43 = scmp.eq.s32.totalorder %s17, 0
    %p44 = por %p42, %p43
    %s46 = sadd.s32 %s45, 1
    %p49 = scmp.eq.s32.totalorder %s11, 1
    %p50 = scmp.ne.s32.totalorder %s45, %s47
    %p51 = scmp.eq.s32.totalorder %s11, 0
    %p52 = por %p50, %p51
    %p53 = scmp.ne.s32.totalorder %s45, %s47
    %p54 = scmp.eq.s32.totalorder %s16, 1
    %p55 = por %p53, %p54
    %p56 = scmp.ne.s32.totalorder %s47, %s48
    %p57 = scmp.eq.s32.totalorder %s16, 0
    %p58 = por %p56, %p57
    %p59 = scmp.ne.s32.totalorder %s47, %s48
    %p60 = scmp.eq.s32.totalorder %s17, 1
    %p61 = por %p59, %p60
    %p63 = scmp.ne.s32.totalorder %s48, %s62
    %p64 = scmp.eq.s32.totalorder %s17, 0
    %p65 = por %p63, %p64
    %s67 = sadd.s32 %s66, 1
    %p70 = scmp.eq.s32.totalorder %s11, 1
    %p71 = scmp.ne.s32.totalorder %s66, %s68
    %p72 = scmp.eq.s32.totalorder %s11, 0
    %p73 = por %p71, %p72
    %p74 = scmp.ne.s32.totalorder %s66, %s68
    %p75 = scmp.eq.s32.totalorder %s16, 1
    %p76 = por %p74, %p75
    %p77 = scmp.ne.s32.totalorder %s68, %s69
    %p78 = scmp.eq.s32.totalorder %s16, 0
    %p79 = por %p77, %p78
    %p80 = scmp.ne.s32.totalorder %s68, %s69
    %p81 = scmp.eq.s32.totalorder %s17, 1
    %p82 = por %p80, %p81
    %p84 = scmp.ne.s32.totalorder %s69, %s83
    %p85 = scmp.eq.s32.totalorder %s17, 0
    %p86 = por %p84, %p85
    %s88 = sadd.s32 %s87, 1
    %p91 = scmp.eq.s32.totalorder %s11, 1
    %p92 = scmp.ne.s32.totalorder %s87, %s89
    %p93 = scmp.eq.s32.totalorder %s11, 0
    %p94 = por %p92, %p93
    %p95 = scmp.ne.s32.totalorder %s87, %s89
    %p96 = scmp.eq.s32.totalorder %s16, 1
    %p97 = por %p95, %p96
    %p98 = scmp.ne.s32.totalorder %s89, %s90
    %p99 = scmp.eq.s32.totalorder %s16, 0
    %p100 = por %p98, %p99
    %p101 = scmp.ne.s32.totalorder %s89, %s90
    %p102 = scmp.eq.s32.totalorder %s17, 1
    %p103 = por %p101, %p102
    %p105 = scmp.ne.s32.totalorder %s90, %s104
    %p106 = scmp.eq.s32.totalorder %s17, 0
    %p107 = por %p105, %p106
    %s109 = sadd.s32 %s108, 1
    %p112 = scmp.eq.s32.totalorder %s11, 1
    %p113 = scmp.ne.s32.totalorder %s108, %s110
    %p114 = scmp.eq.s32.totalorder %s11, 0
    %p115 = por %p113, %p114
    %p116 = scmp.ne.s32.totalorder %s108, %s110
    %p117 = scmp.eq.s32.totalorder %s16, 1
    %p118 = por %p116, %p117
    %p119 = scmp.ne.s32.totalorder %s110, %s111
    %p120 = scmp.eq.s32.totalorder %s16, 0
    %p121 = por %p119, %p120
    %p122 = scmp.ne.s32.totalorder %s110, %s111
    %p123 = scmp.eq.s32.totalorder %s17, 1
    %p124 = por %p122, %p123
    %p126 = scmp.ne.s32.totalorder %s111, %s125
    %p127 = scmp.eq.s32.totalorder %s17, 0
    %p128 = por %p126, %p127
    %s129 = ssub.s32 %s11, %s18
    %p130 = scmp.eq.s32.totalorder %s129, 0
    %s132 = sadd.s32 %s131, 1
    %s133 = scalar_select %p130, %s131, %s132
    %p136 = pneg %p130
    %p137 = scmp.eq.s32.totalorder %s11, 1
    %p138 = por %p136, %p137
    %p139 = scmp.ne.s32.totalorder %s131, %s134
    %p140 = scmp.eq.s32.totalorder %s11, 0
    %p141 = por %p139, %p140
    %p142 = scmp.ne.s32.totalorder %s131, %s134
    %p143 = scmp.eq.s32.totalorder %s16, 1
    %p144 = por %p142, %p143
    %p145 = scmp.ne.s32.totalorder %s134, %s135
    %p146 = scmp.eq.s32.totalorder %s16, 0
    %p147 = por %p145, %p146
    %p148 = scmp.ne.s32.totalorder %s134, %s135
    %p149 = scmp.eq.s32.totalorder %s17, 1
    %p150 = por %p148, %p149
    %p152 = scmp.ne.s32.totalorder %s135, %s151
    %p153 = scmp.eq.s32.totalorder %s17, 0
    %p154 = por %p152, %p153
    %p155 = scmp.le.s32.totalorder 1, %s11
    %p156 = scmp.lt.s32.totalorder %s11, 3
    %p157 = pnand %p155, %p156
    %p158 = pneg %p157
    // Predicated region
    $region9: #{tpu_custom_call.1} parent=5 // pred_check
      _
    $region10: #{tpu_custom_call.1} parent=5 // pred_check_branch
      %160 = sbr.rel (%p157) target = $region12
    $region11: #{tpu_custom_call.1} parent=5 // pred_region
      %s161 = ssub.s32 %s11, 1
      // Predicated region
      $region13: #{tpu_custom_call.1} parent=11 // pred_check
        %p162 = pneg %p58
      $region14: #{tpu_custom_call.1} parent=11 // pred_check_branch
        %164 = sbr.rel (%p162) target = $region16
      $region15: #{tpu_custom_call.1} parent=11 // pred_region
        _
      $region16: #{tpu_custom_call.1} parent=11 // pred_fallthru
        _
      // Predicated region
      $region17: #{tpu_custom_call.1} parent=11 // pred_check
        %p165 = pneg %p79
      $region18: #{tpu_custom_call.1} parent=11 // pred_check_branch
        %167 = sbr.rel (%p165) target = $region20
      $region19: #{tpu_custom_call.1} parent=11 // pred_region
        _
      $region20: #{tpu_custom_call.1} parent=11 // pred_fallthru
        _
      // Predicated region
      $region21: #{tpu_custom_call.1} parent=11 // pred_check
        %p168 = pneg %p100
      $region22: #{tpu_custom_call.1} parent=11 // pred_check_branch
        %170 = sbr.rel (%p168) target = $region24
      $region23: #{tpu_custom_call.1} parent=11 // pred_region
        _
      $region24: #{tpu_custom_call.1} parent=11 // pred_fallthru
        _
      // Predicated region
      $region25: #{tpu_custom_call.1} parent=11 // pred_check
        %p171 = pneg %p121
      $region26: #{tpu_custom_call.1} parent=11 // pred_check_branch
        %173 = sbr.rel (%p171) target = $region28
      $region27: #{tpu_custom_call.1} parent=11 // pred_region
        _
      $region28: #{tpu_custom_call.1} parent=11 // pred_fallthru
        _
    $region12: #{tpu_custom_call.1} parent=5 // pred_fallthru
      _
    %p174 = scmp.lt.s32.totalorder %s11, 2
    // Predicated region
    $region29: #{tpu_custom_call.1} parent=5 // pred_check
      %p175 = pneg %p174
    $region30: #{tpu_custom_call.1} parent=5 // pred_check_branch
      %177 = sbr.rel (%p175) target = $region32
    $region31: #{tpu_custom_call.1} parent=5 // pred_region
      // Predicated region
      $region33: #{tpu_custom_call.1} parent=31 // pred_check
        %p178 = pneg %p31
      $region34: #{tpu_custom_call.1} parent=31 // pred_check_branch
        %180 = sbr.rel (%p178) target = $region36
      $region35: #{tpu_custom_call.1} parent=31 // pred_region
        %p181 = scmp.lt.s32.totalorder %s11, 1
        %s182 = scalar_select %p181, %s11, 1
        %s183 = smul.addr %s182, 32
        %s184 = smul.addr %s183, 8
        %s185 = scalar_lea.vmem %s0, %s184
      $region36: #{tpu_custom_call.1} parent=31 // pred_fallthru
        _
    $region32: #{tpu_custom_call.1} parent=5 // pred_fallthru
      _
    %p186 = scmp.le.s32.totalorder 1, %s11
    %p187 = scmp.lt.s32.totalorder %s11, 3
    %p188 = pnand %p186, %p187
    %p189 = pneg %p188
    // Predicated region
    $region37: #{tpu_custom_call.1} parent=5 // pred_check
      _
    $region38: #{tpu_custom_call.1} parent=5 // pred_check_branch
      %191 = sbr.rel (%p188) target = $region40
    $region39: #{tpu_custom_call.1} parent=5 // pred_region
      %s192 = ssub.s32 %s11, 1
      %p193 = scmp.lt.s32.totalorder %s16, 1
      %s194 = scalar_select %p193, %s16, 1
      %s195 = smul.addr %s194, 32
      %s196 = smul.addr %s195, 8
      %s197 = scalar_lea.vmem %s0, %s196
      %p198 = pneg %p37
      %p199 = pneg %p34
      %p200 = pneg %p58
      %p201 = pneg %p55
      %p202 = pneg %p79
      %p203 = pneg %p76
      %p204 = pneg %p100
      %p205 = pneg %p97
      %p206 = pneg %p121
      %p207 = pneg %p118
      %p208 = pneg %p147
      %p209 = pneg %p144
      %p210 = scmp.lt.s32.totalorder %s16, 1
      %s211 = scalar_select %p210, %s16, 1
      %s212 = smul.addr %s211, 8
      %s213 = smul.addr %s212, 8
      %s214 = scalar_lea.vmem %s5, %s213
      %p215 = scmp.lt.s32.totalorder %s16, 1
      %s216 = scalar_select %p215, %s16, 1
      %s217 = smul.addr %s216, 32
      %s218 = smul.addr %s217, 8
      %s219 = scalar_lea.vmem %s0, %s218
      %p220 = scmp.lt.s32.totalorder %s16, 1
      %s221 = scalar_select %p220, %s16, 1
      %s222 = smul.addr %s221, 8
      %s223 = smul.addr %s222, 8
      %s224 = scalar_lea.vmem %s5, %s223
      %vm226 = vcmask 27648
      %227 = vst.msk [vmem:[#allocation2] sm:$0xf] %vm226, 0
      %vm228 = vcmask 24576
      %229 = vst.msk [vmem:[#allocation2 + $0x4] sm:$0x1] %vm228, 0
      %s230 = scalar_lea.vmem [#allocation2], 72
      %231 = vst.msk [vmem:[%s230] sm:$0xf] %vm226, 0
      %232 = vst.msk [vmem:[%s230 + $0x4] sm:$0x1] %vm228, 0
      %s233 = scalar_lea.vmem [#allocation2], 8
      %vm234 = vcmask 24576
      %vm235 = vsmask.f32 256
      %vm236 = vmand %vm234, %vm235
      %v237 = vld [vmem:[%s233] sm:$0x1]
      %v238 = vsel %vm236, 0, %v237
      %239 = vst [vmem:[%s233] sm:$0x1] %v238
      %v240 = vld [vmem:[%s233 + $0x8] sm:$0x1]
      %v241 = vsel %vm236, 0, %v240
      %242 = vst [vmem:[%s233 + $0x8] sm:$0x1] %v241
      %v243 = vld [vmem:[%s233 + $0x10] sm:$0x1]
      %v244 = vsel %vm236, 0, %v243
      %245 = vst [vmem:[%s233 + $0x10] sm:$0x1] %v244
      %v246 = vld [vmem:[%s233 + $0x18] sm:$0x1]
      %v247 = vsel %vm236, 0, %v246
      %248 = vst [vmem:[%s233 + $0x18] sm:$0x1] %v247
      %v249 = vld [vmem:[%s233 + $0x20] sm:$0x1]
      %v250 = vsel %vm236, 0, %v249
      %251 = vst [vmem:[%s233 + $0x20] sm:$0x1] %v250
      %v252 = vld [vmem:[%s233 + $0x28] sm:$0x1]
      %v253 = vsel %vm236, 0, %v252
      %254 = vst [vmem:[%s233 + $0x28] sm:$0x1] %v253
      %v255 = vld [vmem:[%s233 + $0x30] sm:$0x1]
      %v256 = vsel %vm236, 0, %v255
      %257 = vst [vmem:[%s233 + $0x30] sm:$0x1] %v256
      %v258 = vld [vmem:[%s233 + $0x38] sm:$0x1]
      %v259 = vsel %vm236, 0, %v258
      %260 = vst [vmem:[%s233 + $0x38] sm:$0x1] %v259
      %vm261 = vsmask.f32 7938
      %vm262 = vmand %vm234, %vm261
      %v263 = vld [vmem:[%s233 + $0x4] sm:$0x1]
      %v264 = vsel %vm262, 0, %v263
      %265 = vst [vmem:[%s233 + $0x4] sm:$0x1] %v264
      %v266 = vld [vmem:[%s233 + $0xc] sm:$0x1]
      %v267 = vsel %vm262, 0, %v266
      %268 = vst [vmem:[%s233 + $0xc] sm:$0x1] %v267
      %v269 = vld [vmem:[%s233 + $0x14] sm:$0x1]
      %v270 = vsel %vm262, 0, %v269
      %271 = vst [vmem:[%s233 + $0x14] sm:$0x1] %v270
      %v272 = vld [vmem:[%s233 + $0x1c] sm:$0x1]
      %v273 = vsel %vm262, 0, %v272
      %274 = vst [vmem:[%s233 + $0x1c] sm:$0x1] %v273
      %v275 = vld [vmem:[%s233 + $0x24] sm:$0x1]
      %v276 = vsel %vm262, 0, %v275
      %277 = vst [vmem:[%s233 + $0x24] sm:$0x1] %v276
      %v278 = vld [vmem:[%s233 + $0x2c] sm:$0x1]
      %v279 = vsel %vm262, 0, %v278
      %280 = vst [vmem:[%s233 + $0x2c] sm:$0x1] %v279
      %v281 = vld [vmem:[%s233 + $0x34] sm:$0x1]
      %v282 = vsel %vm262, 0, %v281
      %283 = vst [vmem:[%s233 + $0x34] sm:$0x1] %v282
      %v284 = vld [vmem:[%s233 + $0x3c] sm:$0x1]
      %v285 = vsel %vm262, 0, %v284
      %286 = vst [vmem:[%s233 + $0x3c] sm:$0x1] %v285
      %vm287 = vcmask 60416
      %288 = vst.msk [vmem:[#allocation3] sm:$0xf] %vm287, 0
      %vm289 = vcmask 57344
      %290 = vst.msk [vmem:[#allocation3 + $0x4] sm:$0x1] %vm289, 0
      %s291 = scalar_lea.vmem [#allocation3], 72
      %292 = vst.msk [vmem:[%s291] sm:$0xf] %vm287, 0
      %293 = vst.msk [vmem:[%s291 + $0x4] sm:$0x1] %vm289, 0
      %s294 = scalar_lea.vmem [#allocation3], 8
      %vm295 = vcmask 57344
      %vm296 = vmand %vm295, %vm235
      %v297 = vld [vmem:[%s294] sm:$0x1]
      %v298 = vsel %vm296, 0, %v297
      %299 = vst [vmem:[%s294] sm:$0x1] %v298
      %v300 = vld [vmem:[%s294 + $0x8] sm:$0x1]
      %v301 = vsel %vm296, 0, %v300
      %302 = vst [vmem:[%s294 + $0x8] sm:$0x1] %v301
      %v303 = vld [vmem:[%s294 + $0x10] sm:$0x1]
      %v304 = vsel %vm296, 0, %v303
      %305 = vst [vmem:[%s294 + $0x10] sm:$0x1] %v304
      %v306 = vld [vmem:[%s294 + $0x18] sm:$0x1]
      %v307 = vsel %vm296, 0, %v306
      %308 = vst [vmem:[%s294 + $0x18] sm:$0x1] %v307
      %v309 = vld [vmem:[%s294 + $0x20] sm:$0x1]
      %v310 = vsel %vm296, 0, %v309
      %311 = vst [vmem:[%s294 + $0x20] sm:$0x1] %v310
      %v312 = vld [vmem:[%s294 + $0x28] sm:$0x1]
      %v313 = vsel %vm296, 0, %v312
      %314 = vst [vmem:[%s294 + $0x28] sm:$0x1] %v313
      %v315 = vld [vmem:[%s294 + $0x30] sm:$0x1]
      %v316 = vsel %vm296, 0, %v315
      %317 = vst [vmem:[%s294 + $0x30] sm:$0x1] %v316
      %v318 = vld [vmem:[%s294 + $0x38] sm:$0x1]
      %v319 = vsel %vm296, 0, %v318
      %320 = vst [vmem:[%s294 + $0x38] sm:$0x1] %v319
      %vm321 = vmand %vm295, %vm261
      %v322 = vld [vmem:[%s294 + $0x4] sm:$0x1]
      %v323 = vsel %vm321, 0, %v322
      %324 = vst [vmem:[%s294 + $0x4] sm:$0x1] %v323
      %v325 = vld [vmem:[%s294 + $0xc] sm:$0x1]
      %v326 = vsel %vm321, 0, %v325
      %327 = vst [vmem:[%s294 + $0xc] sm:$0x1] %v326
      %v328 = vld [vmem:[%s294 + $0x14] sm:$0x1]
      %v329 = vsel %vm321, 0, %v328
      %330 = vst [vmem:[%s294 + $0x14] sm:$0x1] %v329
      %v331 = vld [vmem:[%s294 + $0x1c] sm:$0x1]
      %v332 = vsel %vm321, 0, %v331
      %333 = vst [vmem:[%s294 + $0x1c] sm:$0x1] %v332
      %v334 = vld [vmem:[%s294 + $0x24] sm:$0x1]
      %v335 = vsel %vm321, 0, %v334
      %336 = vst [vmem:[%s294 + $0x24] sm:$0x1] %v335
      %v337 = vld [vmem:[%s294 + $0x2c] sm:$0x1]
      %v338 = vsel %vm321, 0, %v337
      %339 = vst [vmem:[%s294 + $0x2c] sm:$0x1] %v338
      %v340 = vld [vmem:[%s294 + $0x34] sm:$0x1]
      %v341 = vsel %vm321, 0, %v340
      %342 = vst [vmem:[%s294 + $0x34] sm:$0x1] %v341
      %v343 = vld [vmem:[%s294 + $0x3c] sm:$0x1]
      %v344 = vsel %vm321, 0, %v343
      %345 = vst [vmem:[%s294 + $0x3c] sm:$0x1] %v344
      %v346 = vld [vmem:[%s219] sm:$0xff]
      %v347 = vld [vmem:[%s219 + $0x8] sm:$0xff]
      %v348 = vld [vmem:[%s219 + $0x10] sm:$0xff]
      %v349 = vld [vmem:[%s219 + $0x18] sm:$0xff]
      %v350 = vld [vmem:[%s219 + $0x20] sm:$0xff]
      %v351 = vld [vmem:[%s219 + $0x28] sm:$0xff]
      %v352 = vld [vmem:[%s219 + $0x30] sm:$0xff]
      %v353 = vld [vmem:[%s219 + $0x38] sm:$0xff]
      %s354 = scalar_lea.vmem %s219, 64
      %v355 = vld [vmem:[%s354] sm:$0xff]
      %v356 = vld [vmem:[%s354 + $0x8] sm:$0xff]
      %v357 = vld [vmem:[%s354 + $0x10] sm:$0xff]
      %v358 = vld [vmem:[%s354 + $0x18] sm:$0xff]
      %v359 = vld [vmem:[%s354 + $0x20] sm:$0xff]
      %v360 = vld [vmem:[%s354 + $0x28] sm:$0xff]
      %v361 = vld [vmem:[%s354 + $0x30] sm:$0xff]
      %v362 = vld [vmem:[%s354 + $0x38] sm:$0xff]
      %v363 = vmax.f32 %v346, %v355
      %v364 = vmax.f32 %v347, %v356
      %v365 = vmax.f32 %v348, %v357
      %v366 = vmax.f32 %v349, %v358
      %v367 = vmax.f32 %v350, %v359
      %v368 = vmax.f32 %v351, %v360
      %v369 = vmax.f32 %v352, %v361
      %v370 = vmax.f32 %v353, %v362
      %s371 = scalar_lea.vmem %s219, 128
      %v372 = vld [vmem:[%s371] sm:$0xff]
      %v373 = vld [vmem:[%s371 + $0x8] sm:$0xff]
      %v374 = vld [vmem:[%s371 + $0x10] sm:$0xff]
      %v375 = vld [vmem:[%s371 + $0x18] sm:$0xff]
      %v376 = vld [vmem:[%s371 + $0x20] sm:$0xff]
      %v377 = vld [vmem:[%s371 + $0x28] sm:$0xff]
      %v378 = vld [vmem:[%s371 + $0x30] sm:$0xff]
      %v379 = vld [vmem:[%s371 + $0x38] sm:$0xff]
      %s380 = scalar_lea.vmem %s219, 192
      %v381 = vld [vmem:[%s380] sm:$0xff]
      %v382 = vld [vmem:[%s380 + $0x8] sm:$0xff]
      %v383 = vld [vmem:[%s380 + $0x10] sm:$0xff]
      %v384 = vld [vmem:[%s380 + $0x18] sm:$0xff]
      %v385 = vld [vmem:[%s380 + $0x20] sm:$0xff]
      %v386 = vld [vmem:[%s380 + $0x28] sm:$0xff]
      %v387 = vld [vmem:[%s380 + $0x30] sm:$0xff]
      %v388 = vld [vmem:[%s380 + $0x38] sm:$0xff]
      %v389 = vmax.f32 %v372, %v381
      %v390 = vmax.f32 %v373, %v382
      %v391 = vmax.f32 %v374, %v383
      %v392 = vmax.f32 %v375, %v384
      %v393 = vmax.f32 %v376, %v385
      %v394 = vmax.f32 %v377, %v386
      %v395 = vmax.f32 %v378, %v387
      %v396 = vmax.f32 %v379, %v388
      %v397 = vmax.f32 %v363, %v389
      %v398 = vmax.f32 %v364, %v390
      %v399 = vmax.f32 %v365, %v391
      %v400 = vmax.f32 %v366, %v392
      %v401 = vmax.f32 %v367, %v393
      %v402 = vmax.f32 %v368, %v394
      %v403 = vmax.f32 %v369, %v395
      %v404 = vmax.f32 %v370, %v396
      %v405 = vpack.c.bf16 %v397, %v397
      %v406 = vpack.c.bf16 %v398, %v398
      %v407 = vpack.c.bf16 %v399, %v399
      %v408 = vpack.c.bf16 %v400, %v400
      %v409 = vpack.c.bf16 %v401, %v401
      %v410 = vpack.c.bf16 %v402, %v402
      %v411 = vpack.c.bf16 %v403, %v403
      %v412 = vpack.c.bf16 %v404, %v404
      %v421 = vunpack.c.l.b16 %v405
      %v422 = vunpack.c.l.b16 %v406
      %v423 = vunpack.c.l.b16 %v407
      %v424 = vunpack.c.l.b16 %v408
      %v425 = vunpack.c.l.b16 %v409
      %v426 = vunpack.c.l.b16 %v410
      %v427 = vunpack.c.l.b16 %v411
      %v428 = vunpack.c.l.b16 %v412
      %v429 = vpack.c.b16 %v421, %v421
      %v430 = vpack.c.b16 %v422, %v422
      %v431 = vpack.c.b16 %v423, %v423
      %v432 = vpack.c.b16 %v424, %v424
      %v433 = vpack.c.b16 %v425, %v425
      %v434 = vpack.c.b16 %v426, %v426
      %v435 = vpack.c.b16 %v427, %v427
      %v436 = vpack.c.b16 %v428, %v428
      %v438 = vshrl.u32 %v429, 16
      %v440 = vrot.slane %v438, 7
      %v441 = vshll.u32 %v429, 16
      %v443 = vor.u32 %v440, %v441
      %v444 = vrot.slane %v440, 4
      %v446 = vshrl.u32 %v430, 16
      %v448 = vrot.slane %v446, 7
      %v449 = vshll.u32 %v430, 16
      %v451 = vor.u32 %v448, %v449
      %v452 = vrot.slane %v448, 4
      %v454 = vshrl.u32 %v431, 16
      %v456 = vrot.slane %v454, 7
      %v457 = vshll.u32 %v431, 16
      %v459 = vor.u32 %v456, %v457
      %v460 = vrot.slane %v456, 4
      %v462 = vshrl.u32 %v432, 16
      %v464 = vrot.slane %v462, 7
      %v465 = vshll.u32 %v432, 16
      %v467 = vor.u32 %v464, %v465
      %v468 = vrot.slane %v464, 4
      %v470 = vshrl.u32 %v433, 16
      %v472 = vrot.slane %v470, 7
      %v473 = vshll.u32 %v433, 16
      %v475 = vor.u32 %v472, %v473
      %v476 = vrot.slane %v472, 4
      %v478 = vshrl.u32 %v434, 16
      %v480 = vrot.slane %v478, 7
      %v481 = vshll.u32 %v434, 16
      %v483 = vor.u32 %v480, %v481
      %v484 = vrot.slane %v480, 4
      %v486 = vshrl.u32 %v435, 16
      %v488 = vrot.slane %v486, 7
      %v489 = vshll.u32 %v435, 16
      %v491 = vor.u32 %v488, %v489
      %v492 = vrot.slane %v488, 4
      %v494 = vshrl.u32 %v436, 16
      %v496 = vrot.slane %v494, 7
      %v497 = vshll.u32 %v436, 16
      %v499 = vor.u32 %v496, %v497
      %v500 = vrot.slane %v496, 4
      %vm517 = vcmask 27648
      %vm518 = vmand %vm517, %vm261
      %v519 = vld [vmem:[%s233] sm:$0xf]
      %v520 = vsel %vm518, %v443, %v519
      %521 = vst [vmem:[%s233] sm:$0xf] %v520
      %v522 = vld [vmem:[%s233 + $0x4] sm:$0x1]
      %v523 = vsel %vm236, %v444, %v522
      %524 = vst [vmem:[%s233 + $0x4] sm:$0x1] %v523
      %v525 = vld [vmem:[%s233 + $0x8] sm:$0xf]
      %v526 = vsel %vm518, %v451, %v525
      %527 = vst [vmem:[%s233 + $0x8] sm:$0xf] %v526
      %v528 = vld [vmem:[%s233 + $0xc] sm:$0x1]
      %v529 = vsel %vm236, %v452, %v528
      %530 = vst [vmem:[%s233 + $0xc] sm:$0x1] %v529
      %v531 = vld [vmem:[%s233 + $0x10] sm:$0xf]
      %v532 = vsel %vm518, %v459, %v531
      %533 = vst [vmem:[%s233 + $0x10] sm:$0xf] %v532
      %v534 = vld [vmem:[%s233 + $0x14] sm:$0x1]
      %v535 = vsel %vm236, %v460, %v534
      %536 = vst [vmem:[%s233 + $0x14] sm:$0x1] %v535
      %v537 = vld [vmem:[%s233 + $0x18] sm:$0xf]
      %v538 = vsel %vm518, %v467, %v537
      %539 = vst [vmem:[%s233 + $0x18] sm:$0xf] %v538
      %v540 = vld [vmem:[%s233 + $0x1c] sm:$0x1]
      %v541 = vsel %vm236, %v468, %v540
      %542 = vst [vmem:[%s233 + $0x1c] sm:$0x1] %v541
      %v543 = vld [vmem:[%s233 + $0x20] sm:$0xf]
      %v544 = vsel %vm518, %v475, %v543
      %545 = vst [vmem:[%s233 + $0x20] sm:$0xf] %v544
      %v546 = vld [vmem:[%s233 + $0x24] sm:$0x1]
      %v547 = vsel %vm236, %v476, %v546
      %548 = vst [vmem:[%s233 + $0x24] sm:$0x1] %v547
      %v549 = vld [vmem:[%s233 + $0x28] sm:$0xf]
      %v550 = vsel %vm518, %v483, %v549
      %551 = vst [vmem:[%s233 + $0x28] sm:$0xf] %v550
      %v552 = vld [vmem:[%s233 + $0x2c] sm:$0x1]
      %v553 = vsel %vm236, %v484, %v552
      %554 = vst [vmem:[%s233 + $0x2c] sm:$0x1] %v553
      %v555 = vld [vmem:[%s233 + $0x30] sm:$0xf]
      %v556 = vsel %vm518, %v491, %v555
      %557 = vst [vmem:[%s233 + $0x30] sm:$0xf] %v556
      %v558 = vld [vmem:[%s233 + $0x34] sm:$0x1]
      %v559 = vsel %vm236, %v492, %v558
      %560 = vst [vmem:[%s233 + $0x34] sm:$0x1] %v559
      %v561 = vld [vmem:[%s233 + $0x38] sm:$0xf]
      %v562 = vsel %vm518, %v499, %v561
      %563 = vst [vmem:[%s233 + $0x38] sm:$0xf] %v562
      %v564 = vld [vmem:[%s233 + $0x3c] sm:$0x1]
      %v565 = vsel %vm236, %v500, %v564
      %566 = vst [vmem:[%s233 + $0x3c] sm:$0x1] %v565
      %v567 = vld [vmem:[#allocation2] sm:$0xf]
      %v568 = vld [vmem:[#allocation2 + $0x8] sm:$0xf]
      %v569 = vld [vmem:[#allocation2 + $0x10] sm:$0xf]
      %v570 = vld [vmem:[#allocation2 + $0x18] sm:$0xf]
      %v571 = vld [vmem:[#allocation2 + $0x20] sm:$0xf]
      %v572 = vld [vmem:[#allocation2 + $0x28] sm:$0xf]
      %v573 = vld [vmem:[#allocation2 + $0x30] sm:$0xf]
      %v574 = vld [vmem:[#allocation2 + $0x38] sm:$0xf]
      %575 = vst.msk [vmem:[#allocation4] sm:$0xf] %vm226, %v567
      %576 = vst.msk [vmem:[#allocation4 + $0x4] sm:$0xf] %vm226, %v568
      %577 = vst.msk [vmem:[#allocation4 + $0x8] sm:$0xf] %vm226, %v569
      %578 = vst.msk [vmem:[#allocation4 + $0xc] sm:$0xf] %vm226, %v570
      %579 = vst.msk [vmem:[#allocation4 + $0x10] sm:$0xf] %vm226, %v571
      %580 = vst.msk [vmem:[#allocation4 + $0x14] sm:$0xf] %vm226, %v572
      %581 = vst.msk [vmem:[#allocation4 + $0x18] sm:$0xf] %vm226, %v573
      %582 = vst.msk [vmem:[#allocation4 + $0x1c] sm:$0xf] %vm226, %v574
      %v583 = vld [vmem:[#allocation2] sm:$0xf]
      %v584 = vld [vmem:[#allocation2 + $0x4] sm:$0x1]
      %v585 = vld [vmem:[#allocation2 + $0x8] sm:$0xf]
      %v586 = vld [vmem:[#allocation2 + $0xc] sm:$0x1]
      %v587 = vld [vmem:[#allocation2 + $0x10] sm:$0xf]
      %v588 = vld [vmem:[#allocation2 + $0x14] sm:$0x1]
      %v589 = vld [vmem:[#allocation2 + $0x18] sm:$0xf]
      %v590 = vld [vmem:[#allocation2 + $0x1c] sm:$0x1]
      %v591 = vld [vmem:[#allocation2 + $0x20] sm:$0xf]
      %v592 = vld [vmem:[#allocation2 + $0x24] sm:$0x1]
      %v593 = vld [vmem:[#allocation2 + $0x28] sm:$0xf]
      %v594 = vld [vmem:[#allocation2 + $0x2c] sm:$0x1]
      %v595 = vld [vmem:[#allocation2 + $0x30] sm:$0xf]
      %v596 = vld [vmem:[#allocation2 + $0x34] sm:$0x1]
      %v597 = vld [vmem:[#allocation2 + $0x38] sm:$0xf]
      %v598 = vld [vmem:[#allocation2 + $0x3c] sm:$0x1]
      %vm599 = vsmask.f32 3328
      %vm600 = vsmask.f32 7440
      %vm601 = vmor %vm599, %vm600
      %v603 = vshrl.u32 %v583, 16
      %v605 = vrot.slane %v603, 4
      %v606 = vshll.u32 %v583, 16
      %v608 = vrot.slane %v606, 5
      %v609 = vor.u32 %v605, %v608
      %v610 = vrot.slane %v609, 4
      %v612 = vshll.u32 %v584, 16
      %v614 = vrot.slane %v612, 5
      %v615 = vsel %vm601, %v610, %v614
      %v617 = vshrl.u32 %v585, 16
      %v619 = vrot.slane %v617, 4
      %v620 = vshll.u32 %v585, 16
      %v622 = vrot.slane %v620, 5
      %v623 = vor.u32 %v619, %v622
      %v624 = vrot.slane %v623, 4
      %v626 = vshll.u32 %v586, 16
      %v628 = vrot.slane %v626, 5
      %v629 = vsel %vm601, %v624, %v628
      %v631 = vshrl.u32 %v587, 16
      %v633 = vrot.slane %v631, 4
      %v634 = vshll.u32 %v587, 16
      %v636 = vrot.slane %v634, 5
      %v637 = vor.u32 %v633, %v636
      %v638 = vrot.slane %v637, 4
      %v640 = vshll.u32 %v588, 16
      %v642 = vrot.slane %v640, 5
      %v643 = vsel %vm601, %v638, %v642
      %v645 = vshrl.u32 %v589, 16
      %v647 = vrot.slane %v645, 4
      %v648 = vshll.u32 %v589, 16
      %v650 = vrot.slane %v648, 5
      %v651 = vor.u32 %v647, %v650
      %v652 = vrot.slane %v651, 4
      %v654 = vshll.u32 %v590, 16
      %v656 = vrot.slane %v654, 5
      %v657 = vsel %vm601, %v652, %v656
      %v659 = vshrl.u32 %v591, 16
      %v661 = vrot.slane %v659, 4
      %v662 = vshll.u32 %v591, 16
      %v664 = vrot.slane %v662, 5
      %v665 = vor.u32 %v661, %v664
      %v666 = vrot.slane %v665, 4
      %v668 = vshll.u32 %v592, 16
      %v670 = vrot.slane %v668, 5
      %v671 = vsel %vm601, %v666, %v670
      %v673 = vshrl.u32 %v593, 16
      %v675 = vrot.slane %v673, 4
      %v676 = vshll.u32 %v593, 16
      %v678 = vrot.slane %v676, 5
      %v679 = vor.u32 %v675, %v678
      %v680 = vrot.slane %v679, 4
      %v682 = vshll.u32 %v594, 16
      %v684 = vrot.slane %v682, 5
      %v685 = vsel %vm601, %v680, %v684
      %v687 = vshrl.u32 %v595, 16
      %v689 = vrot.slane %v687, 4
      %v690 = vshll.u32 %v595, 16
      %v692 = vrot.slane %v690, 5
      %v693 = vor.u32 %v689, %v692
      %v694 = vrot.slane %v693, 4
      %v696 = vshll.u32 %v596, 16
      %v698 = vrot.slane %v696, 5
      %v699 = vsel %vm601, %v694, %v698
      %v701 = vshrl.u32 %v597, 16
      %v703 = vrot.slane %v701, 4
      %v704 = vshll.u32 %v597, 16
      %v706 = vrot.slane %v704, 5
      %v707 = vor.u32 %v703, %v706
      %v708 = vrot.slane %v707, 4
      %v710 = vshll.u32 %v598, 16
      %v712 = vrot.slane %v710, 5
      %v713 = vsel %vm601, %v708, %v712
      %714 = vrot.lane.b32.xlu0 %v615, 4
      %v715 = vpop.permute.xlu0 %714
      %716 = vrot.lane.b32.xlu0 %v629, 4
      %v717 = vpop.permute.xlu0 %716
      %718 = vrot.lane.b32.xlu0 %v643, 4
      %v719 = vpop.permute.xlu0 %718
      %720 = vrot.lane.b32.xlu0 %v657, 4
      %v721 = vpop.permute.xlu0 %720
      %722 = vrot.lane.b32.xlu0 %v671, 4
      %v723 = vpop.permute.xlu0 %722
      %724 = vrot.lane.b32.xlu0 %v685, 4
      %v725 = vpop.permute.xlu0 %724
      %726 = vrot.lane.b32.xlu0 %v699, 4
      %v727 = vpop.permute.xlu0 %726
      %728 = vrot.lane.b32.xlu0 %v713, 4
      %v729 = vpop.permute.xlu0 %728
      %vm738 = vcmask 60448
      %739 = vst.msk [vmem:[#allocation4] sm:$0xf] %vm738, %v715
      %740 = vst.msk [vmem:[#allocation4 + $0x4] sm:$0xf] %vm738, %v717
      %741 = vst.msk [vmem:[#allocation4 + $0x8] sm:$0xf] %vm738, %v719
      %742 = vst.msk [vmem:[#allocation4 + $0xc] sm:$0xf] %vm738, %v721
      %743 = vst.msk [vmem:[#allocation4 + $0x10] sm:$0xf] %vm738, %v723
      %744 = vst.msk [vmem:[#allocation4 + $0x14] sm:$0xf] %vm738, %v725
      %745 = vst.msk [vmem:[#allocation4 + $0x18] sm:$0xf] %vm738, %v727
      %746 = vst.msk [vmem:[#allocation4 + $0x1c] sm:$0xf] %vm738, %v729
      %v747 = vld [vmem:[#allocation2] sm:$0xe]
      %v748 = vld [vmem:[#allocation2 + $0x4] sm:$0x1]
      %v749 = vld [vmem:[#allocation2 + $0x8] sm:$0xe]
      %v750 = vld [vmem:[#allocation2 + $0xc] sm:$0x1]
      %v751 = vld [vmem:[#allocation2 + $0x10] sm:$0xe]
      %v752 = vld [vmem:[#allocation2 + $0x14] sm:$0x1]
      %v753 = vld [vmem:[#allocation2 + $0x18] sm:$0xe]
      %v754 = vld [vmem:[#allocation2 + $0x1c] sm:$0x1]
      %v755 = vld [vmem:[#allocation2 + $0x20] sm:$0xe]
      %v756 = vld [vmem:[#allocation2 + $0x24] sm:$0x1]
      %v757 = vld [vmem:[#allocation2 + $0x28] sm:$0xe]
      %v758 = vld [vmem:[#allocation2 + $0x2c] sm:$0x1]
      %v759 = vld [vmem:[#allocation2 + $0x30] sm:$0xe]
      %v760 = vld [vmem:[#allocation2 + $0x34] sm:$0x1]
      %v761 = vld [vmem:[#allocation2 + $0x38] sm:$0xe]
      %v762 = vld [vmem:[#allocation2 + $0x3c] sm:$0x1]
      %vm779 = vcmask 1042432
      %vm780 = vcmask 1046532
      %vm781 = vmor %vm779, %vm780
      %v782 = vrot.slane %v747, 5
      %v783 = vrot.slane %v782, 4
      %v784 = vrot.slane %v748, 5
      %v785 = vsel %vm781, %v783, %v784
      %v786 = vrot.slane %v749, 5
      %v787 = vrot.slane %v786, 4
      %v788 = vrot.slane %v750, 5
      %v789 = vsel %vm781, %v787, %v788
      %v790 = vrot.slane %v751, 5
      %v791 = vrot.slane %v790, 4
      %v792 = vrot.slane %v752, 5
      %v793 = vsel %vm781, %v791, %v792
      %v794 = vrot.slane %v753, 5
      %v795 = vrot.slane %v794, 4
      %v796 = vrot.slane %v754, 5
      %v797 = vsel %vm781, %v795, %v796
      %v798 = vrot.slane %v755, 5
      %v799 = vrot.slane %v798, 4
      %v800 = vrot.slane %v756, 5
      %v801 = vsel %vm781, %v799, %v800
      %v802 = vrot.slane %v757, 5
      %v803 = vrot.slane %v802, 4
      %v804 = vrot.slane %v758, 5
      %v805 = vsel %vm781, %v803, %v804
      %v806 = vrot.slane %v759, 5
      %v807 = vrot.slane %v806, 4
      %v808 = vrot.slane %v760, 5
      %v809 = vsel %vm781, %v807, %v808
      %v810 = vrot.slane %v761, 5
      %v811 = vrot.slane %v810, 4
      %v812 = vrot.slane %v762, 5
      %v813 = vsel %vm781, %v811, %v812
      %814 = vrot.lane.b32.xlu0 %v785, 8
      %v815 = vpop.permute.xlu0 %814
      %816 = vrot.lane.b32.xlu0 %v789, 8
      %v817 = vpop.permute.xlu0 %816
      %818 = vrot.lane.b32.xlu0 %v793, 8
      %v819 = vpop.permute.xlu0 %818
      %820 = vrot.lane.b32.xlu0 %v797, 8
      %v821 = vpop.permute.xlu0 %820
      %822 = vrot.lane.b32.xlu0 %v801, 8
      %v823 = vpop.permute.xlu0 %822
      %824 = vrot.lane.b32.xlu0 %v805, 8
      %v825 = vpop.permute.xlu0 %824
      %826 = vrot.lane.b32.xlu0 %v809, 8
      %v827 = vpop.permute.xlu0 %826
      %828 = vrot.lane.b32.xlu0 %v813, 8
      %v829 = vpop.permute.xlu0 %828
      %vm838 = vcmask 93248
      %839 = vst.msk [vmem:[#allocation4] sm:$0xf] %vm838, %v815
      %840 = vst.msk [vmem:[#allocation4 + $0x4] sm:$0xf] %vm838, %v817
      %841 = vst.msk [vmem:[#allocation4 + $0x8] sm:$0xf] %vm838, %v819
      %842 = vst.msk [vmem:[#allocation4 + $0xc] sm:$0xf] %vm838, %v821
      %843 = vst.msk [vmem:[#allocation4 + $0x10] sm:$0xf] %vm838, %v823
      %844 = vst.msk [vmem:[#allocation4 + $0x14] sm:$0xf] %vm838, %v825
      %845 = vst.msk [vmem:[#allocation4 + $0x18] sm:$0xf] %vm838, %v827
      %846 = vst.msk [vmem:[#allocation4 + $0x1c] sm:$0xf] %vm838, %v829
      %v847 = vld [vmem:[%s233] sm:$0xf]
      %v848 = vld [vmem:[%s233 + $0x8] sm:$0xf]
      %v849 = vld [vmem:[%s233 + $0x10] sm:$0xf]
      %v850 = vld [vmem:[%s233 + $0x18] sm:$0xf]
      %v851 = vld [vmem:[%s233 + $0x20] sm:$0xf]
      %v852 = vld [vmem:[%s233 + $0x28] sm:$0xf]
      %v853 = vld [vmem:[%s233 + $0x30] sm:$0xf]
      %v854 = vld [vmem:[%s233 + $0x38] sm:$0xf]
      %863 = vrot.lane.b32.xlu0 %v847, 12
      %v864 = vpop.permute.xlu0 %863
      %865 = vrot.lane.b32.xlu0 %v848, 12
      %v866 = vpop.permute.xlu0 %865
      %867 = vrot.lane.b32.xlu0 %v849, 12
      %v868 = vpop.permute.xlu0 %867
      %869 = vrot.lane.b32.xlu0 %v850, 12
      %v870 = vpop.permute.xlu0 %869
      %871 = vrot.lane.b32.xlu0 %v851, 12
      %v872 = vpop.permute.xlu0 %871
      %873 = vrot.lane.b32.xlu0 %v852, 12
      %v874 = vpop.permute.xlu0 %873
      %875 = vrot.lane.b32.xlu0 %v853, 12
      %v876 = vpop.permute.xlu0 %875
      %877 = vrot.lane.b32.xlu0 %v854, 12
      %v878 = vpop.permute.xlu0 %877
      %vm887 = vcmask 126048
      %888 = vst.msk [vmem:[#allocation4] sm:$0xf] %vm887, %v864
      %889 = vst.msk [vmem:[#allocation4 + $0x4] sm:$0xf] %vm887, %v866
      %890 = vst.msk [vmem:[#allocation4 + $0x8] sm:$0xf] %vm887, %v868
      %891 = vst.msk [vmem:[#allocation4 + $0xc] sm:$0xf] %vm887, %v870
      %892 = vst.msk [vmem:[#allocation4 + $0x10] sm:$0xf] %vm887, %v872
      %893 = vst.msk [vmem:[#allocation4 + $0x14] sm:$0xf] %vm887, %v874
      %894 = vst.msk [vmem:[#allocation4 + $0x18] sm:$0xf] %vm887, %v876
      %895 = vst.msk [vmem:[#allocation4 + $0x1c] sm:$0xf] %vm887, %v878
      %v896 = vld [vmem:[%s233] sm:$0xf]
      %v897 = vld [vmem:[%s233 + $0x4] sm:$0x1]
      %v898 = vld [vmem:[%s233 + $0x8] sm:$0xf]
      %v899 = vld [vmem:[%s233 + $0xc] sm:$0x1]
      %v900 = vld [vmem:[%s233 + $0x10] sm:$0xf]
      %v901 = vld [vmem:[%s233 + $0x14] sm:$0x1]
      %v902 = vld [vmem:[%s233 + $0x18] sm:$0xf]
      %v903 = vld [vmem:[%s233 + $0x1c] sm:$0x1]
      %v904 = vld [vmem:[%s233 + $0x20] sm:$0xf]
      %v905 = vld [vmem:[%s233 + $0x24] sm:$0x1]
      %v906 = vld [vmem:[%s233 + $0x28] sm:$0xf]
      %v907 = vld [vmem:[%s233 + $0x2c] sm:$0x1]
      %v908 = vld [vmem:[%s233 + $0x30] sm:$0xf]
      %v909 = vld [vmem:[%s233 + $0x34] sm:$0x1]
      %v910 = vld [vmem:[%s233 + $0x38] sm:$0xf]
      %v911 = vld [vmem:[%s233 + $0x3c] sm:$0x1]
      %v913 = vshrl.u32 %v896, 16
      %v915 = vrot.slane %v913, 4
      %v916 = vshll.u32 %v896, 16
      %v918 = vrot.slane %v916, 5
      %v919 = vor.u32 %v915, %v918
      %v920 = vrot.slane %v919, 4
      %v922 = vshll.u32 %v897, 16
      %v924 = vrot.slane %v922, 5
      %v925 = vsel %vm601, %v920, %v924
      %v927 = vshrl.u32 %v898, 16
      %v929 = vrot.slane %v927, 4
      %v930 = vshll.u32 %v898, 16
      %v932 = vrot.slane %v930, 5
      %v933 = vor.u32 %v929, %v932
      %v934 = vrot.slane %v933, 4
      %v936 = vshll.u32 %v899, 16
      %v938 = vrot.slane %v936, 5
      %v939 = vsel %vm601, %v934, %v938
      %v941 = vshrl.u32 %v900, 16
      %v943 = vrot.slane %v941, 4
      %v944 = vshll.u32 %v900, 16
      %v946 = vrot.slane %v944, 5
      %v947 = vor.u32 %v943, %v946
      %v948 = vrot.slane %v947, 4
      %v950 = vshll.u32 %v901, 16
      %v952 = vrot.slane %v950, 5
      %v953 = vsel %vm601, %v948, %v952
      %v955 = vshrl.u32 %v902, 16
      %v957 = vrot.slane %v955, 4
      %v958 = vshll.u32 %v902, 16
      %v960 = vrot.slane %v958, 5
      %v961 = vor.u32 %v957, %v960
      %v962 = vrot.slane %v961, 4
      %v964 = vshll.u32 %v903, 16
      %v966 = vrot.slane %v964, 5
      %v967 = vsel %vm601, %v962, %v966
      %v969 = vshrl.u32 %v904, 16
      %v971 = vrot.slane %v969, 4
      %v972 = vshll.u32 %v904, 16
      %v974 = vrot.slane %v972, 5
      %v975 = vor.u32 %v971, %v974
      %v976 = vrot.slane %v975, 4
      %v978 = vshll.u32 %v905, 16
      %v980 = vrot.slane %v978, 5
      %v981 = vsel %vm601, %v976, %v980
      %v983 = vshrl.u32 %v906, 16
      %v985 = vrot.slane %v983, 4
      %v986 = vshll.u32 %v906, 16
      %v988 = vrot.slane %v986, 5
      %v989 = vor.u32 %v985, %v988
      %v990 = vrot.slane %v989, 4
      %v992 = vshll.u32 %v907, 16
      %v994 = vrot.slane %v992, 5
      %v995 = vsel %vm601, %v990, %v994
      %v997 = vshrl.u32 %v908, 16
      %v999 = vrot.slane %v997, 4
      %v1000 = vshll.u32 %v908, 16
      %v1002 = vrot.slane %v1000, 5
      %v1003 = vor.u32 %v999, %v1002
      %v1004 = vrot.slane %v1003, 4
      %v1006 = vshll.u32 %v909, 16
      %v1008 = vrot.slane %v1006, 5
      %v1009 = vsel %vm601, %v1004, %v1008
      %v1011 = vshrl.u32 %v910, 16
      %v1013 = vrot.slane %v1011, 4
      %v1014 = vshll.u32 %v910, 16
      %v1016 = vrot.slane %v1014, 5
      %v1017 = vor.u32 %v1013, %v1016
      %v1018 = vrot.slane %v1017, 4
      %v1020 = vshll.u32 %v911, 16
      %v1022 = vrot.slane %v1020, 5
      %v1023 = vsel %vm601, %v1018, %v1022
      %1024 = vrot.lane.b32.xlu0 %v925, 16
      %v1025 = vpop.permute.xlu0 %1024
      %1026 = vrot.lane.b32.xlu0 %v939, 16
      %v1027 = vpop.permute.xlu0 %1026
      %1028 = vrot.lane.b32.xlu0 %v953, 16
      %v1029 = vpop.permute.xlu0 %1028
      %1030 = vrot.lane.b32.xlu0 %v967, 16
      %v1031 = vpop.permute.xlu0 %1030
      %1032 = vrot.lane.b32.xlu0 %v981, 16
      %v1033 = vpop.permute.xlu0 %1032
      %1034 = vrot.lane.b32.xlu0 %v995, 16
      %v1035 = vpop.permute.xlu0 %1034
      %1036 = vrot.lane.b32.xlu0 %v1009, 16
      %v1037 = vpop.permute.xlu0 %1036
      %1038 = vrot.lane.b32.xlu0 %v1023, 16
      %v1039 = vpop.permute.xlu0 %1038
      %vm1048 = vcmask 158848
      %1049 = vst.msk [vmem:[#allocation4] sm:$0xf] %vm1048, %v1025
      %1050 = vst.msk [vmem:[#allocation4 + $0x4] sm:$0xf] %vm1048, %v1027
      %1051 = vst.msk [vmem:[#allocation4 + $0x8] sm:$0xf] %vm1048, %v1029
      %1052 = vst.msk [vmem:[#allocation4 + $0xc] sm:$0xf] %vm1048, %v1031
      %1053 = vst.msk [vmem:[#allocation4 + $0x10] sm:$0xf] %vm1048, %v1033
      %1054 = vst.msk [vmem:[#allocation4 + $0x14] sm:$0xf] %vm1048, %v1035
      %1055 = vst.msk [vmem:[#allocation4 + $0x18] sm:$0xf] %vm1048, %v1037
      %1056 = vst.msk [vmem:[#allocation4 + $0x1c] sm:$0xf] %vm1048, %v1039
      %v1057 = vld [vmem:[%s233] sm:$0xe]
      %v1058 = vld [vmem:[%s233 + $0x4] sm:$0x1]
      %v1059 = vld [vmem:[%s233 + $0x8] sm:$0xe]
      %v1060 = vld [vmem:[%s233 + $0xc] sm:$0x1]
      %v1061 = vld [vmem:[%s233 + $0x10] sm:$0xe]
      %v1062 = vld [vmem:[%s233 + $0x14] sm:$0x1]
      %v1063 = vld [vmem:[%s233 + $0x18] sm:$0xe]
      %v1064 = vld [vmem:[%s233 + $0x1c] sm:$0x1]
      %v1065 = vld [vmem:[%s233 + $0x20] sm:$0xe]
      %v1066 = vld [vmem:[%s233 + $0x24] sm:$0x1]
      %v1067 = vld [vmem:[%s233 + $0x28] sm:$0xe]
      %v1068 = vld [vmem:[%s233 + $0x2c] sm:$0x1]
      %v1069 = vld [vmem:[%s233 + $0x30] sm:$0xe]
      %v1070 = vld [vmem:[%s233 + $0x34] sm:$0x1]
      %v1071 = vld [vmem:[%s233 + $0x38] sm:$0xe]
      %v1072 = vld [vmem:[%s233 + $0x3c] sm:$0x1]
      %v1089 = vrot.slane %v1057, 5
      %v1090 = vrot.slane %v1089, 4
      %v1091 = vrot.slane %v1058, 5
      %v1092 = vsel %vm781, %v1090, %v1091
      %v1093 = vrot.slane %v1059, 5
      %v1094 = vrot.slane %v1093, 4
      %v1095 = vrot.slane %v1060, 5
      %v1096 = vsel %vm781, %v1094, %v1095
      %v1097 = vrot.slane %v1061, 5
      %v1098 = vrot.slane %v1097, 4
      %v1099 = vrot.slane %v1062, 5
      %v1100 = vsel %vm781, %v1098, %v1099
      %v1101 = vrot.slane %v1063, 5
      %v1102 = vrot.slane %v1101, 4
      %v1103 = vrot.slane %v1064, 5
      %v1104 = vsel %vm781, %v1102, %v1103
      %v1105 = vrot.slane %v1065, 5
      %v1106 = vrot.slane %v1105, 4
      %v1107 = vrot.slane %v1066, 5
      %v1108 = vsel %vm781, %v1106, %v1107
      %v1109 = vrot.slane %v1067, 5
      %v1110 = vrot.slane %v1109, 4
      %v1111 = vrot.slane %v1068, 5
      %v1112 = vsel %vm781, %v1110, %v1111
      %v1113 = vrot.slane %v1069, 5
      %v1114 = vrot.slane %v1113, 4
      %v1115 = vrot.slane %v1070, 5
      %v1116 = vsel %vm781, %v1114, %v1115
      %v1117 = vrot.slane %v1071, 5
      %v1118 = vrot.slane %v1117, 4
      %v1119 = vrot.slane %v1072, 5
      %v1120 = vsel %vm781, %v1118, %v1119
      %1121 = vrot.lane.b32.xlu0 %v1092, 20
      %v1122 = vpop.permute.xlu0 %1121
      %1123 = vrot.lane.b32.xlu0 %v1096, 20
      %v1124 = vpop.permute.xlu0 %1123
      %1125 = vrot.lane.b32.xlu0 %v1100, 20
      %v1126 = vpop.permute.xlu0 %1125
      %1127 = vrot.lane.b32.xlu0 %v1104, 20
      %v1128 = vpop.permute.xlu0 %1127
      %1129 = vrot.lane.b32.xlu0 %v1108, 20
      %v1130 = vpop.permute.xlu0 %1129
      %1131 = vrot.lane.b32.xlu0 %v1112, 20
      %v1132 = vpop.permute.xlu0 %1131
      %1133 = vrot.lane.b32.xlu0 %v1116, 20
      %v1134 = vpop.permute.xlu0 %1133
      %1135 = vrot.lane.b32.xlu0 %v1120, 20
      %v1136 = vpop.permute.xlu0 %1135
      %vm1145 = vcmask 191648
      %1146 = vst.msk [vmem:[#allocation4] sm:$0xf] %vm1145, %v1122
      %1147 = vst.msk [vmem:[#allocation4 + $0x4] sm:$0xf] %vm1145, %v1124
      %1148 = vst.msk [vmem:[#allocation4 + $0x8] sm:$0xf] %vm1145, %v1126
      %1149 = vst.msk [vmem:[#allocation4 + $0xc] sm:$0xf] %vm1145, %v1128
      %1150 = vst.msk [vmem:[#allocation4 + $0x10] sm:$0xf] %vm1145, %v1130
      %1151 = vst.msk [vmem:[#allocation4 + $0x14] sm:$0xf] %vm1145, %v1132
      %1152 = vst.msk [vmem:[#allocation4 + $0x18] sm:$0xf] %vm1145, %v1134
      %1153 = vst.msk [vmem:[#allocation4 + $0x1c] sm:$0xf] %vm1145, %v1136
      %s1154 = scalar_lea.vmem [#allocation2], 16
      %v1155 = vld [vmem:[%s1154] sm:$0xf]
      %v1156 = vld [vmem:[%s1154 + $0x8] sm:$0xf]
      %v1157 = vld [vmem:[%s1154 + $0x10] sm:$0xf]
      %v1158 = vld [vmem:[%s1154 + $0x18] sm:$0xf]
      %v1159 = vld [vmem:[%s1154 + $0x20] sm:$0xf]
      %v1160 = vld [vmem:[%s1154 + $0x28] sm:$0xf]
      %v1161 = vld [vmem:[%s1154 + $0x30] sm:$0xf]
      %v1162 = vld [vmem:[%s1154 + $0x38] sm:$0xf]
      %1171 = vrot.lane.b32.xlu0 %v1155, 24
      %v1172 = vpop.permute.xlu0 %1171
      %1173 = vrot.lane.b32.xlu0 %v1156, 24
      %v1174 = vpop.permute.xlu0 %1173
      %1175 = vrot.lane.b32.xlu0 %v1157, 24
      %v1176 = vpop.permute.xlu0 %1175
      %1177 = vrot.lane.b32.xlu0 %v1158, 24
      %v1178 = vpop.permute.xlu0 %1177
      %1179 = vrot.lane.b32.xlu0 %v1159, 24
      %v1180 = vpop.permute.xlu0 %1179
      %1181 = vrot.lane.b32.xlu0 %v1160, 24
      %v1182 = vpop.permute.xlu0 %1181
      %1183 = vrot.lane.b32.xlu0 %v1161, 24
      %v1184 = vpop.permute.xlu0 %1183
      %1185 = vrot.lane.b32.xlu0 %v1162, 24
      %v1186 = vpop.permute.xlu0 %1185
      %vm1195 = vcmask 224448
      %1196 = vst.msk [vmem:[#allocation4] sm:$0xf] %vm1195, %v1172
      %1197 = vst.msk [vmem:[#allocation4 + $0x4] sm:$0xf] %vm1195, %v1174
      %1198 = vst.msk [vmem:[#allocation4 + $0x8] sm:$0xf] %vm1195, %v1176
      %1199 = vst.msk [vmem:[#allocation4 + $0xc] sm:$0xf] %vm1195, %v1178
      %1200 = vst.msk [vmem:[#allocation4 + $0x10] sm:$0xf] %vm1195, %v1180
      %1201 = vst.msk [vmem:[#allocation4 + $0x14] sm:$0xf] %vm1195, %v1182
      %1202 = vst.msk [vmem:[#allocation4 + $0x18] sm:$0xf] %vm1195, %v1184
      %1203 = vst.msk [vmem:[#allocation4 + $0x1c] sm:$0xf] %vm1195, %v1186
      %v1204 = vld [vmem:[%s1154] sm:$0xf]
      %v1205 = vld [vmem:[%s1154 + $0x4] sm:$0x1]
      %v1206 = vld [vmem:[%s1154 + $0x8] sm:$0xf]
      %v1207 = vld [vmem:[%s1154 + $0xc] sm:$0x1]
      %v1208 = vld [vmem:[%s1154 + $0x10] sm:$0xf]
      %v1209 = vld [vmem:[%s1154 + $0x14] sm:$0x1]
      %v1210 = vld [vmem:[%s1154 + $0x18] sm:$0xf]
      %v1211 = vld [vmem:[%s1154 + $0x1c] sm:$0x1]
      %v1212 = vld [vmem:[%s1154 + $0x20] sm:$0xf]
      %v1213 = vld [vmem:[%s1154 + $0x24] sm:$0x1]
      %v1214 = vld [vmem:[%s1154 + $0x28] sm:$0xf]
      %v1215 = vld [vmem:[%s1154 + $0x2c] sm:$0x1]
      %v1216 = vld [vmem:[%s1154 + $0x30] sm:$0xf]
      %v1217 = vld [vmem:[%s1154 + $0x34] sm:$0x1]
      %v1218 = vld [vmem:[%s1154 + $0x38] sm:$0xf]
      %v1219 = vld [vmem:[%s1154 + $0x3c] sm:$0x1]
      %v1221 = vshrl.u32 %v1204, 16
      %v1223 = vrot.slane %v1221, 4
      %v1224 = vshll.u32 %v1204, 16
      %v1226 = vrot.slane %v1224, 5
      %v1227 = vor.u32 %v1223, %v1226
      %v1228 = vrot.slane %v1227, 4
      %v1230 = vshll.u32 %v1205, 16
      %v1232 = vrot.slane %v1230, 5
      %v1233 = vsel %vm601, %v1228, %v1232
      %v1235 = vshrl.u32 %v1206, 16
      %v1237 = vrot.slane %v1235, 4
      %v1238 = vshll.u32 %v1206, 16
      %v1240 = vrot.slane %v1238, 5
      %v1241 = vor.u32 %v1237, %v1240
      %v1242 = vrot.slane %v1241, 4
      %v1244 = vshll.u32 %v1207, 16
      %v1246 = vrot.slane %v1244, 5
      %v1247 = vsel %vm601, %v1242, %v1246
      %v1249 = vshrl.u32 %v1208, 16
      %v1251 = vrot.slane %v1249, 4
      %v1252 = vshll.u32 %v1208, 16
      %v1254 = vrot.slane %v1252, 5
      %v1255 = vor.u32 %v1251, %v1254
      %v1256 = vrot.slane %v1255, 4
      %v1258 = vshll.u32 %v1209, 16
      %v1260 = vrot.slane %v1258, 5
      %v1261 = vsel %vm601, %v1256, %v1260
      %v1263 = vshrl.u32 %v1210, 16
      %v1265 = vrot.slane %v1263, 4
      %v1266 = vshll.u32 %v1210, 16
      %v1268 = vrot.slane %v1266, 5
      %v1269 = vor.u32 %v1265, %v1268
      %v1270 = vrot.slane %v1269, 4
      %v1272 = vshll.u32 %v1211, 16
      %v1274 = vrot.slane %v1272, 5
      %v1275 = vsel %vm601, %v1270, %v1274
      %v1277 = vshrl.u32 %v1212, 16
      %v1279 = vrot.slane %v1277, 4
      %v1280 = vshll.u32 %v1212, 16
      %v1282 = vrot.slane %v1280, 5
      %v1283 = vor.u32 %v1279, %v1282
      %v1284 = vrot.slane %v1283, 4
      %v1286 = vshll.u32 %v1213, 16
      %v1288 = vrot.slane %v1286, 5
      %v1289 = vsel %vm601, %v1284, %v1288
      %v1291 = vshrl.u32 %v1214, 16
      %v1293 = vrot.slane %v1291, 4
      %v1294 = vshll.u32 %v1214, 16
      %v1296 = vrot.slane %v1294, 5
      %v1297 = vor.u32 %v1293, %v1296
      %v1298 = vrot.slane %v1297, 4
      %v1300 = vshll.u32 %v1215, 16
      %v1302 = vrot.slane %v1300, 5
      %v1303 = vsel %vm601, %v1298, %v1302
      %v1305 = vshrl.u32 %v1216, 16
      %v1307 = vrot.slane %v1305, 4
      %v1308 = vshll.u32 %v1216, 16
      %v1310 = vrot.slane %v1308, 5
      %v1311 = vor.u32 %v1307, %v1310
      %v1312 = vrot.slane %v1311, 4
      %v1314 = vshll.u32 %v1217, 16
      %v1316 = vrot.slane %v1314, 5
      %v1317 = vsel %vm601, %v1312, %v1316
      %v1319 = vshrl.u32 %v1218, 16
      %v1321 = vrot.slane %v1319, 4
      %v1322 = vshll.u32 %v1218, 16
      %v1324 = vrot.slane %v1322, 5
      %v1325 = vor.u32 %v1321, %v1324
      %v1326 = vrot.slane %v1325, 4
      %v1328 = vshll.u32 %v1219, 16
      %v1330 = vrot.slane %v1328, 5
      %v1331 = vsel %vm601, %v1326, %v1330
      %1332 = vrot.lane.b32.xlu0 %v1233, 28
      %v1333 = vpop.permute.xlu0 %1332
      %1334 = vrot.lane.b32.xlu0 %v1247, 28
      %v1335 = vpop.permute.xlu0 %1334
      %1336 = vrot.lane.b32.xlu0 %v1261, 28
      %v1337 = vpop.permute.xlu0 %1336
      %1338 = vrot.lane.b32.xlu0 %v1275, 28
      %v1339 = vpop.permute.xlu0 %1338
      %1340 = vrot.lane.b32.xlu0 %v1289, 28
      %v1341 = vpop.permute.xlu0 %1340
      %1342 = vrot.lane.b32.xlu0 %v1303, 28
      %v1343 = vpop.permute.xlu0 %1342
      %1344 = vrot.lane.b32.xlu0 %v1317, 28
      %v1345 = vpop.permute.xlu0 %1344
      %1346 = vrot.lane.b32.xlu0 %v1331, 28
      %v1347 = vpop.permute.xlu0 %1346
      %vm1356 = vcmask 257248
      %1357 = vst.msk [vmem:[#allocation4] sm:$0xf] %vm1356, %v1333
      %1358 = vst.msk [vmem:[#allocation4 + $0x4] sm:$0xf] %vm1356, %v1335
      %1359 = vst.msk [vmem:[#allocation4 + $0x8] sm:$0xf] %vm1356, %v1337
      %1360 = vst.msk [vmem:[#allocation4 + $0xc] sm:$0xf] %vm1356, %v1339
      %1361 = vst.msk [vmem:[#allocation4 + $0x10] sm:$0xf] %vm1356, %v1341
      %1362 = vst.msk [vmem:[#allocation4 + $0x14] sm:$0xf] %vm1356, %v1343
      %1363 = vst.msk [vmem:[#allocation4 + $0x18] sm:$0xf] %vm1356, %v1345
      %1364 = vst.msk [vmem:[#allocation4 + $0x1c] sm:$0xf] %vm1356, %v1347
      %v1365 = vld [vmem:[%s1154] sm:$0xe]
      %v1366 = vld [vmem:[%s1154 + $0x4] sm:$0x1]
      %v1367 = vld [vmem:[%s1154 + $0x8] sm:$0xe]
      %v1368 = vld [vmem:[%s1154 + $0xc] sm:$0x1]
      %v1369 = vld [vmem:[%s1154 + $0x10] sm:$0xe]
      %v1370 = vld [vmem:[%s1154 + $0x14] sm:$0x1]
      %v1371 = vld [vmem:[%s1154 + $0x18] sm:$0xe]
      %v1372 = vld [vmem:[%s1154 + $0x1c] sm:$0x1]
      %v1373 = vld [vmem:[%s1154 + $0x20] sm:$0xe]
      %v1374 = vld [vmem:[%s1154 + $0x24] sm:$0x1]
      %v1375 = vld [vmem:[%s1154 + $0x28] sm:$0xe]
      %v1376 = vld [vmem:[%s1154 + $0x2c] sm:$0x1]
      %v1377 = vld [vmem:[%s1154 + $0x30] sm:$0xe]
      %v1378 = vld [vmem:[%s1154 + $0x34] sm:$0x1]
      %v1379 = vld [vmem:[%s1154 + $0x38] sm:$0xe]
      %v1380 = vld [vmem:[%s1154 + $0x3c] sm:$0x1]
      %v1397 = vrot.slane %v1365, 5
      %v1398 = vrot.slane %v1397, 4
      %v1399 = vrot.slane %v1366, 5
      %v1400 = vsel %vm781, %v1398, %v1399
      %v1401 = vrot.slane %v1367, 5
      %v1402 = vrot.slane %v1401, 4
      %v1403 = vrot.slane %v1368, 5
      %v1404 = vsel %vm781, %v1402, %v1403
      %v1405 = vrot.slane %v1369, 5
      %v1406 = vrot.slane %v1405, 4
      %v1407 = vrot.slane %v1370, 5
      %v1408 = vsel %vm781, %v1406, %v1407
      %v1409 = vrot.slane %v1371, 5
      %v1410 = vrot.slane %v1409, 4
      %v1411 = vrot.slane %v1372, 5
      %v1412 = vsel %vm781, %v1410, %v1411
      %v1413 = vrot.slane %v1373, 5
      %v1414 = vrot.slane %v1413, 4
      %v1415 = vrot.slane %v1374, 5
      %v1416 = vsel %vm781, %v1414, %v1415
      %v1417 = vrot.slane %v1375, 5
      %v1418 = vrot.slane %v1417, 4
      %v1419 = vrot.slane %v1376, 5
      %v1420 = vsel %vm781, %v1418, %v1419
      %v1421 = vrot.slane %v1377, 5
      %v1422 = vrot.slane %v1421, 4
      %v1423 = vrot.slane %v1378, 5
      %v1424 = vsel %vm781, %v1422, %v1423
      %v1425 = vrot.slane %v1379, 5
      %v1426 = vrot.slane %v1425, 4
      %v1427 = vrot.slane %v1380, 5
      %v1428 = vsel %vm781, %v1426, %v1427
      %1429 = vrot.lane.b32.xlu0 %v1400, 32
      %v1430 = vpop.permute.xlu0 %1429
      %1431 = vrot.lane.b32.xlu0 %v1404, 32
      %v1432 = vpop.permute.xlu0 %1431
      %1433 = vrot.lane.b32.xlu0 %v1408, 32
      %v1434 = vpop.permute.xlu0 %1433
      %1435 = vrot.lane.b32.xlu0 %v1412, 32
      %v1436 = vpop.permute.xlu0 %1435
      %1437 = vrot.lane.b32.xlu0 %v1416, 32
      %v1438 = vpop.permute.xlu0 %1437
      %1439 = vrot.lane.b32.xlu0 %v1420, 32
      %v1440 = vpop.permute.xlu0 %1439
      %1441 = vrot.lane.b32.xlu0 %v1424, 32
      %v1442 = vpop.permute.xlu0 %1441
      %1443 = vrot.lane.b32.xlu0 %v1428, 32
      %v1444 = vpop.permute.xlu0 %1443
      %vm1453 = vcmask 290048
      %1454 = vst.msk [vmem:[#allocation4] sm:$0xf] %vm1453, %v1430
      %1455 = vst.msk [vmem:[#allocation4 + $0x4] sm:$0xf] %vm1453, %v1432
      %1456 = vst.msk [vmem:[#allocation4 + $0x8] sm:$0xf] %vm1453, %v1434
      %1457 = vst.msk [vmem:[#allocation4 + $0xc] sm:$0xf] %vm1453, %v1436
      %1458 = vst.msk [vmem:[#allocation4 + $0x10] sm:$0xf] %vm1453, %v1438
      %1459 = vst.msk [vmem:[#allocation4 + $0x14] sm:$0xf] %vm1453, %v1440
      %1460 = vst.msk [vmem:[#allocation4 + $0x18] sm:$0xf] %vm1453, %v1442
      %1461 = vst.msk [vmem:[#allocation4 + $0x1c] sm:$0xf] %vm1453, %v1444
      %v1462 = vld [vmem:[#allocation4] sm:$0xf]
      %v1463 = vld [vmem:[#allocation4 + $0x4] sm:$0xf]
      %v1464 = vld [vmem:[#allocation4 + $0x8] sm:$0xf]
      %v1465 = vld [vmem:[#allocation4 + $0xc] sm:$0xf]
      %v1466 = vld [vmem:[#allocation4 + $0x10] sm:$0xf]
      %v1467 = vld [vmem:[#allocation4 + $0x14] sm:$0xf]
      %v1468 = vld [vmem:[#allocation4 + $0x18] sm:$0xf]
      %v1469 = vld [vmem:[#allocation4 + $0x1c] sm:$0xf]
      %v1470 = vld [vmem:[%s1] sm:$0xf]
      %v1471 = vld [vmem:[%s1 + $0x4] sm:$0xf]
      %v1472 = vld [vmem:[%s1 + $0x8] sm:$0xf]
      %v1473 = vld [vmem:[%s1 + $0xc] sm:$0xf]
      %v1474 = vld [vmem:[%s1 + $0x10] sm:$0x3]
      %v1475 = vld [vmem:[%s2] sm:$0x1]
      %v1477 = vlaneseq
      %v1478 = vshrl.u32 %v1477, 7
      %v1479 = vsub.s32 0, %v1478
      %v1480 = vrot.slane %v1475, %v1479
      %v1490 = vunpack.c.l.b16 %v1462
      %v1491 = vunpack.c.l.b16 %v1463
      %v1492 = vunpack.c.l.b16 %v1464
      %v1493 = vunpack.c.l.b16 %v1465
      %v1494 = vunpack.c.l.b16 %v1466
      %v1495 = vunpack.c.l.b16 %v1467
      %v1496 = vunpack.c.l.b16 %v1468
      %v1497 = vunpack.c.l.b16 %v1469
      %v1498 = vpack.c.b16 %v1491, %v1490
      %v1499 = vpack.c.b16 %v1493, %v1492
      %v1500 = vpack.c.b16 %v1495, %v1494
      %v1501 = vpack.c.b16 %v1497, %v1496
      %v1507 = vunpack.c.l.b16 %v1470
      %v1508 = vunpack.c.l.b16 %v1471
      %v1509 = vunpack.c.l.b16 %v1472
      %v1510 = vunpack.c.l.b16 %v1473
      %v1511 = vunpack.c.l.b16 %v1474
      %v1512 = vpack.c.b16 %v1508, %v1507
      %v1513 = vpack.c.b16 %v1510, %v1509
      %v1514 = vpack.c.b16 %v1511, %v1511
      %vm1517 = vcmask 293888
      %v1519 = vsel %vm1517, %v1498, 0
      %v1522 = vsel %vm1517, %v1499, 0
      %v1525 = vsel %vm1517, %v1500, 0
      %v1528 = vsel %vm1517, %v1501, 0
      %vm1530 = vcmask 1041408
      %v1532 = vsel %vm1530, %v1514, 0
      %1534 = vmatprep.subr.bf16.mxu0 0
      %1535 = vmatpush1.bf16.msra.mxu0 %v1512
      %1536 = vmatprep.subr.bf16.mxu0 0
      %1537 = vmatpush1.bf16.msra.mxu0 %v1513
      %1538 = vmatprep.subr.bf16.mxu0 0
      %1539 = vmatpush1.bf16.msra.mxu0 %v1532
      %1540 = vmatprep.subr.bf16.mxu0 0
      %1541 = vmatpush1.bf16.msra.mxu0 0
      %1542 = vmatprep.subr.bf16.mxu0 0
      %1543 = vmatpush1.bf16.msra.mxu0 0
      %1544 = vmatprep.subr.bf16.mxu0 0
      %1545 = vmatpush1.bf16.msra.mxu0 0
      %1546 = vmatprep.subr.bf16.mxu0 0
      %1547 = vmatpush1.bf16.msra.mxu0 0
      %1548 = vmatprep.subr.bf16.mxu0 0
      %1549 = vmatpush1.bf16.msra.mxu0 0
      %1550 = vmatprep.subr.bf16.mxu0 0
      %1551 = vmatpush1.bf16.msra.mxu0 0
      %1552 = vmatprep.subr.bf16.mxu0 0
      %1553 = vmatpush1.bf16.msra.mxu0 0
      %1554 = vmatprep.subr.bf16.mxu0 0
      %1555 = vmatpush1.bf16.msra.mxu0 0
      %1556 = vmatprep.subr.bf16.mxu0 0
      %1557 = vmatpush1.bf16.msra.mxu0 0
      %1558 = vmatprep.subr.bf16.mxu0 0
      %1559 = vmatpush1.bf16.msra.mxu0 0
      %1560 = vmatprep.subr.bf16.mxu0 0
      %1561 = vmatpush1.bf16.msra.mxu0 0
      %1562 = vmatprep.subr.bf16.mxu0 0
      %1563 = vmatpush1.bf16.msra.mxu0 0
      %1564 = vmatprep.subr.bf16.mxu0 0
      %1565 = vmatpush1.bf16.msra.mxu0 0
      %1566 = vmatprep.mubr.bf16.mxu0 0
      %1567 = vmatmul.mubr.bf16.gmra.mrb[0].mxu0 %v1519
      %v1568 = vpop.f32.mrb[0].mxu0
      %v1569 = vadd.f32 %v1480, %v1568
      %v1570 = vpop.f32.mrb[0].mxu0
      %v1571 = vpop.f32.mrb[0].mxu0
      %v1572 = vadd.f32 %v1480, %v1571
      %v1573 = vpop.f32.mrb[0].mxu0
      %1574 = vmatprep.mubr.bf16.mxu0 0
      %1575 = vmatmul.mubr.bf16.gmra.mrb[0].mxu0 %v1522
      %v1576 = vpop.f32.mrb[0].mxu0
      %v1577 = vadd.f32 %v1480, %v1576
      %v1578 = vpop.f32.mrb[0].mxu0
      %v1579 = vpop.f32.mrb[0].mxu0
      %v1580 = vadd.f32 %v1480, %v1579
      %v1581 = vpop.f32.mrb[0].mxu0
      %1582 = vmatprep.mubr.bf16.mxu0 0
      %1583 = vmatmul.mubr.bf16.gmra.mrb[0].mxu0 %v1525
      %v1584 = vpop.f32.mrb[0].mxu0
      %v1585 = vadd.f32 %v1480, %v1584
      %v1586 = vpop.f32.mrb[0].mxu0
      %v1587 = vpop.f32.mrb[0].mxu0
      %v1588 = vadd.f32 %v1480, %v1587
      %v1589 = vpop.f32.mrb[0].mxu0
      %1590 = vmatprep.mubr.bf16.mxu0 0
      %1591 = vmatmul.mubr.bf16.gmra.mrb[0].mxu0 %v1528
      %v1592 = vpop.f32.mrb[0].mxu0
      %v1593 = vadd.f32 %v1480, %v1592
      %v1594 = vpop.f32.mrb[0].mxu0
      %v1595 = vpop.f32.mrb[0].mxu0
      %v1596 = vadd.f32 %v1480, %v1595
      %v1597 = vpop.f32.mrb[0].mxu0
      %1598 = vdwg.mxu0
      %v1599 = vmax.f32 %v1569, 0.0
      %v1600 = vmax.f32 %v1572, 0.0
      %v1601 = vmax.f32 %v1577, 0.0
      %v1602 = vmax.f32 %v1580, 0.0
      %v1603 = vmax.f32 %v1585, 0.0
      %v1604 = vmax.f32 %v1588, 0.0
      %v1605 = vmax.f32 %v1593, 0.0
      %v1606 = vmax.f32 %v1596, 0.0
      %v1607 = vpack.c.bf16 %v1599, %v1599
      %v1608 = vpack.c.bf16 %v1600, %v1600
      %v1609 = vpack.c.bf16 %v1601, %v1601
      %v1610 = vpack.c.bf16 %v1602, %v1602
      %v1611 = vpack.c.bf16 %v1603, %v1603
      %v1612 = vpack.c.bf16 %v1604, %v1604
      %v1613 = vpack.c.bf16 %v1605, %v1605
      %v1614 = vpack.c.bf16 %v1606, %v1606
      %v1623 = vunpack.c.l.b16 %v1607
      %v1624 = vunpack.c.l.b16 %v1608
      %v1625 = vunpack.c.l.b16 %v1609
      %v1626 = vunpack.c.l.b16 %v1610
      %v1627 = vunpack.c.l.b16 %v1611
      %v1628 = vunpack.c.l.b16 %v1612
      %v1629 = vunpack.c.l.b16 %v1613
      %v1630 = vunpack.c.l.b16 %v1614
      %v1631 = vpack.c.b16 %v1623, %v1623
      %v1632 = vpack.c.b16 %v1624, %v1624
      %v1633 = vpack.c.b16 %v1625, %v1625
      %v1634 = vpack.c.b16 %v1626, %v1626
      %v1635 = vpack.c.b16 %v1627, %v1627
      %v1636 = vpack.c.b16 %v1628, %v1628
      %v1637 = vpack.c.b16 %v1629, %v1629
      %v1638 = vpack.c.b16 %v1630, %v1630
      %v1640 = vshrl.u32 %v1631, 16
      %v1642 = vrot.slane %v1640, 7
      %v1643 = vshll.u32 %v1631, 16
      %v1645 = vor.u32 %v1642, %v1643
      %v1646 = vrot.slane %v1642, 4
      %v1648 = vshrl.u32 %v1632, 16
      %v1650 = vrot.slane %v1648, 7
      %v1651 = vshll.u32 %v1632, 16
      %v1653 = vor.u32 %v1650, %v1651
      %v1654 = vrot.slane %v1650, 4
      %v1656 = vshrl.u32 %v1633, 16
      %v1658 = vrot.slane %v1656, 7
      %v1659 = vshll.u32 %v1633, 16
      %v1661 = vor.u32 %v1658, %v1659
      %v1662 = vrot.slane %v1658, 4
      %v1664 = vshrl.u32 %v1634, 16
      %v1666 = vrot.slane %v1664, 7
      %v1667 = vshll.u32 %v1634, 16
      %v1669 = vor.u32 %v1666, %v1667
      %v1670 = vrot.slane %v1666, 4
      %v1672 = vshrl.u32 %v1635, 16
      %v1674 = vrot.slane %v1672, 7
      %v1675 = vshll.u32 %v1635, 16
      %v1677 = vor.u32 %v1674, %v1675
      %v1678 = vrot.slane %v1674, 4
      %v1680 = vshrl.u32 %v1636, 16
      %v1682 = vrot.slane %v1680, 7
      %v1683 = vshll.u32 %v1636, 16
      %v1685 = vor.u32 %v1682, %v1683
      %v1686 = vrot.slane %v1682, 4
      %v1688 = vshrl.u32 %v1637, 16
      %v1690 = vrot.slane %v1688, 7
      %v1691 = vshll.u32 %v1637, 16
      %v1693 = vor.u32 %v1690, %v1691
      %v1694 = vrot.slane %v1690, 4
      %v1696 = vshrl.u32 %v1638, 16
      %v1698 = vrot.slane %v1696, 7
      %v1699 = vshll.u32 %v1638, 16
      %v1701 = vor.u32 %v1698, %v1699
      %v1702 = vrot.slane %v1698, 4
      %vm1719 = vcmask 60416
      %vm1720 = vmand %vm1719, %vm261
      %v1721 = vld [vmem:[%s294] sm:$0xf]
      %v1722 = vsel %vm1720, %v1645, %v1721
      %1723 = vst [vmem:[%s294] sm:$0xf] %v1722
      %v1724 = vld [vmem:[%s294 + $0x4] sm:$0x1]
      %v1725 = vsel %vm296, %v1646, %v1724
      %1726 = vst [vmem:[%s294 + $0x4] sm:$0x1] %v1725
      %v1727 = vld [vmem:[%s294 + $0x8] sm:$0xf]
      %v1728 = vsel %vm1720, %v1653, %v1727
      %1729 = vst [vmem:[%s294 + $0x8] sm:$0xf] %v1728
      %v1730 = vld [vmem:[%s294 + $0xc] sm:$0x1]
      %v1731 = vsel %vm296, %v1654, %v1730
      %1732 = vst [vmem:[%s294 + $0xc] sm:$0x1] %v1731
      %v1733 = vld [vmem:[%s294 + $0x10] sm:$0xf]
      %v1734 = vsel %vm1720, %v1661, %v1733
      %1735 = vst [vmem:[%s294 + $0x10] sm:$0xf] %v1734
      %v1736 = vld [vmem:[%s294 + $0x14] sm:$0x1]
      %v1737 = vsel %vm296, %v1662, %v1736
      %1738 = vst [vmem:[%s294 + $0x14] sm:$0x1] %v1737
      %v1739 = vld [vmem:[%s294 + $0x18] sm:$0xf]
      %v1740 = vsel %vm1720, %v1669, %v1739
      %1741 = vst [vmem:[%s294 + $0x18] sm:$0xf] %v1740
      %v1742 = vld [vmem:[%s294 + $0x1c] sm:$0x1]
      %v1743 = vsel %vm296, %v1670, %v1742
      %1744 = vst [vmem:[%s294 + $0x1c] sm:$0x1] %v1743
      %v1745 = vld [vmem:[%s294 + $0x20] sm:$0xf]
      %v1746 = vsel %vm1720, %v1677, %v1745
      %1747 = vst [vmem:[%s294 + $0x20] sm:$0xf] %v1746
      %v1748 = vld [vmem:[%s294 + $0x24] sm:$0x1]
      %v1749 = vsel %vm296, %v1678, %v1748
      %1750 = vst [vmem:[%s294 + $0x24] sm:$0x1] %v1749
      %v1751 = vld [vmem:[%s294 + $0x28] sm:$0xf]
      %v1752 = vsel %vm1720, %v1685, %v1751
      %1753 = vst [vmem:[%s294 + $0x28] sm:$0xf] %v1752
      %v1754 = vld [vmem:[%s294 + $0x2c] sm:$0x1]
      %v1755 = vsel %vm296, %v1686, %v1754
      %1756 = vst [vmem:[%s294 + $0x2c] sm:$0x1] %v1755
      %v1757 = vld [vmem:[%s294 + $0x30] sm:$0xf]
      %v1758 = vsel %vm1720, %v1693, %v1757
      %1759 = vst [vmem:[%s294 + $0x30] sm:$0xf] %v1758
      %v1760 = vld [vmem:[%s294 + $0x34] sm:$0x1]
      %v1761 = vsel %vm296, %v1694, %v1760
      %1762 = vst [vmem:[%s294 + $0x34] sm:$0x1] %v1761
      %v1763 = vld [vmem:[%s294 + $0x38] sm:$0xf]
      %v1764 = vsel %vm1720, %v1701, %v1763
      %1765 = vst [vmem:[%s294 + $0x38] sm:$0xf] %v1764
      %v1766 = vld [vmem:[%s294 + $0x3c] sm:$0x1]
      %v1767 = vsel %vm296, %v1702, %v1766
      %1768 = vst [vmem:[%s294 + $0x3c] sm:$0x1] %v1767
      %v1769 = vld [vmem:[#allocation3] sm:$0xf]
      %v1770 = vld [vmem:[#allocation3 + $0x8] sm:$0xf]
      %v1771 = vld [vmem:[#allocation3 + $0x10] sm:$0xf]
      %v1772 = vld [vmem:[#allocation3 + $0x18] sm:$0xf]
      %v1773 = vld [vmem:[#allocation3 + $0x20] sm:$0xf]
      %v1774 = vld [vmem:[#allocation3 + $0x28] sm:$0xf]
      %v1775 = vld [vmem:[#allocation3 + $0x30] sm:$0xf]
      %v1776 = vld [vmem:[#allocation3 + $0x38] sm:$0xf]
      %1777 = vst.msk [vmem:[#allocation5] sm:$0xf] %vm287, %v1769
      %1778 = vst.msk [vmem:[#allocation5 + $0x4] sm:$0xf] %vm287, %v1770
      %1779 = vst.msk [vmem:[#allocation5 + $0x8] sm:$0xf] %vm287, %v1771
      %1780 = vst.msk [vmem:[#allocation5 + $0xc] sm:$0xf] %vm287, %v1772
      %1781 = vst.msk [vmem:[#allocation5 + $0x10] sm:$0xf] %vm287, %v1773
      %1782 = vst.msk [vmem:[#allocation5 + $0x14] sm:$0xf] %vm287, %v1774
      %1783 = vst.msk [vmem:[#allocation5 + $0x18] sm:$0xf] %vm287, %v1775
      %1784 = vst.msk [vmem:[#allocation5 + $0x1c] sm:$0xf] %vm287, %v1776
      %v1785 = vld [vmem:[#allocation3] sm:$0xf]
      %v1786 = vld [vmem:[#allocation3 + $0x4] sm:$0x1]
      %v1787 = vld [vmem:[#allocation3 + $0x8] sm:$0xf]
      %v1788 = vld [vmem:[#allocation3 + $0xc] sm:$0x1]
      %v1789 = vld [vmem:[#allocation3 + $0x10] sm:$0xf]
      %v1790 = vld [vmem:[#allocation3 + $0x14] sm:$0x1]
      %v1791 = vld [vmem:[#allocation3 + $0x18] sm:$0xf]
      %v1792 = vld [vmem:[#allocation3 + $0x1c] sm:$0x1]
      %v1793 = vld [vmem:[#allocation3 + $0x20] sm:$0xf]
      %v1794 = vld [vmem:[#allocation3 + $0x24] sm:$0x1]
      %v1795 = vld [vmem:[#allocation3 + $0x28] sm:$0xf]
      %v1796 = vld [vmem:[#allocation3 + $0x2c] sm:$0x1]
      %v1797 = vld [vmem:[#allocation3 + $0x30] sm:$0xf]
      %v1798 = vld [vmem:[#allocation3 + $0x34] sm:$0x1]
      %v1799 = vld [vmem:[#allocation3 + $0x38] sm:$0xf]
      %v1800 = vld [vmem:[#allocation3 + $0x3c] sm:$0x1]
      %v1802 = vshrl.u32 %v1785, 16
      %v1804 = vrot.slane %v1802, 4
      %v1805 = vshll.u32 %v1785, 16
      %v1807 = vrot.slane %v1805, 5
      %v1808 = vor.u32 %v1804, %v1807
      %v1809 = vrot.slane %v1808, 4
      %v1811 = vshll.u32 %v1786, 16
      %v1813 = vrot.slane %v1811, 5
      %v1814 = vsel %vm601, %v1809, %v1813
      %v1816 = vshrl.u32 %v1787, 16
      %v1818 = vrot.slane %v1816, 4
      %v1819 = vshll.u32 %v1787, 16
      %v1821 = vrot.slane %v1819, 5
      %v1822 = vor.u32 %v1818, %v1821
      %v1823 = vrot.slane %v1822, 4
      %v1825 = vshll.u32 %v1788, 16
      %v1827 = vrot.slane %v1825, 5
      %v1828 = vsel %vm601, %v1823, %v1827
      %v1830 = vshrl.u32 %v1789, 16
      %v1832 = vrot.slane %v1830, 4
      %v1833 = vshll.u32 %v1789, 16
      %v1835 = vrot.slane %v1833, 5
      %v1836 = vor.u32 %v1832, %v1835
      %v1837 = vrot.slane %v1836, 4
      %v1839 = vshll.u32 %v1790, 16
      %v1841 = vrot.slane %v1839, 5
      %v1842 = vsel %vm601, %v1837, %v1841
      %v1844 = vshrl.u32 %v1791, 16
      %v1846 = vrot.slane %v1844, 4
      %v1847 = vshll.u32 %v1791, 16
      %v1849 = vrot.slane %v1847, 5
      %v1850 = vor.u32 %v1846, %v1849
      %v1851 = vrot.slane %v1850, 4
      %v1853 = vshll.u32 %v1792, 16
      %v1855 = vrot.slane %v1853, 5
      %v1856 = vsel %vm601, %v1851, %v1855
      %v1858 = vshrl.u32 %v1793, 16
      %v1860 = vrot.slane %v1858, 4
      %v1861 = vshll.u32 %v1793, 16
      %v1863 = vrot.slane %v1861, 5
      %v1864 = vor.u32 %v1860, %v1863
      %v1865 = vrot.slane %v1864, 4
      %v1867 = vshll.u32 %v1794, 16
      %v1869 = vrot.slane %v1867, 5
      %v1870 = vsel %vm601, %v1865, %v1869
      %v1872 = vshrl.u32 %v1795, 16
      %v1874 = vrot.slane %v1872, 4
      %v1875 = vshll.u32 %v1795, 16
      %v1877 = vrot.slane %v1875, 5
      %v1878 = vor.u32 %v1874, %v1877
      %v1879 = vrot.slane %v1878, 4
      %v1881 = vshll.u32 %v1796, 16
      %v1883 = vrot.slane %v1881, 5
      %v1884 = vsel %vm601, %v1879, %v1883
      %v1886 = vshrl.u32 %v1797, 16
      %v1888 = vrot.slane %v1886, 4
      %v1889 = vshll.u32 %v1797, 16
      %v1891 = vrot.slane %v1889, 5
      %v1892 = vor.u32 %v1888, %v1891
      %v1893 = vrot.slane %v1892, 4
      %v1895 = vshll.u32 %v1798, 16
      %v1897 = vrot.slane %v1895, 5
      %v1898 = vsel %vm601, %v1893, %v1897
      %v1900 = vshrl.u32 %v1799, 16
      %v1902 = vrot.slane %v1900, 4
      %v1903 = vshll.u32 %v1799, 16
      %v1905 = vrot.slane %v1903, 5
      %v1906 = vor.u32 %v1902, %v1905
      %v1907 = vrot.slane %v1906, 4
      %v1909 = vshll.u32 %v1800, 16
      %v1911 = vrot.slane %v1909, 5
      %v1912 = vsel %vm601, %v1907, %v1911
      %1913 = vrot.lane.b32.xlu0 %v1814, 8
      %v1914 = vpop.permute.xlu0 %1913
      %1915 = vrot.lane.b32.xlu0 %v1828, 8
      %v1916 = vpop.permute.xlu0 %1915
      %1917 = vrot.lane.b32.xlu0 %v1842, 8
      %v1918 = vpop.permute.xlu0 %1917
      %1919 = vrot.lane.b32.xlu0 %v1856, 8
      %v1920 = vpop.permute.xlu0 %1919
      %1921 = vrot.lane.b32.xlu0 %v1870, 8
      %v1922 = vpop.permute.xlu0 %1921
      %1923 = vrot.lane.b32.xlu0 %v1884, 8
      %v1924 = vpop.permute.xlu0 %1923
      %1925 = vrot.lane.b32.xlu0 %v1898, 8
      %v1926 = vpop.permute.xlu0 %1925
      %1927 = vrot.lane.b32.xlu0 %v1912, 8
      %v1928 = vpop.permute.xlu0 %1927
      %vm1937 = vcmask 126016
      %1938 = vst.msk [vmem:[#allocation5] sm:$0xf] %vm1937, %v1914
      %1939 = vst.msk [vmem:[#allocation5 + $0x4] sm:$0xf] %vm1937, %v1916
      %1940 = vst.msk [vmem:[#allocation5 + $0x8] sm:$0xf] %vm1937, %v1918
      %1941 = vst.msk [vmem:[#allocation5 + $0xc] sm:$0xf] %vm1937, %v1920
      %1942 = vst.msk [vmem:[#allocation5 + $0x10] sm:$0xf] %vm1937, %v1922
      %1943 = vst.msk [vmem:[#allocation5 + $0x14] sm:$0xf] %vm1937, %v1924
      %1944 = vst.msk [vmem:[#allocation5 + $0x18] sm:$0xf] %vm1937, %v1926
      %1945 = vst.msk [vmem:[#allocation5 + $0x1c] sm:$0xf] %vm1937, %v1928
      %v1946 = vld [vmem:[#allocation3] sm:$0xe]
      %v1947 = vld [vmem:[#allocation3 + $0x4] sm:$0x1]
      %v1948 = vld [vmem:[#allocation3 + $0x8] sm:$0xe]
      %v1949 = vld [vmem:[#allocation3 + $0xc] sm:$0x1]
      %v1950 = vld [vmem:[#allocation3 + $0x10] sm:$0xe]
      %v1951 = vld [vmem:[#allocation3 + $0x14] sm:$0x1]
      %v1952 = vld [vmem:[#allocation3 + $0x18] sm:$0xe]
      %v1953 = vld [vmem:[#allocation3 + $0x1c] sm:$0x1]
      %v1954 = vld [vmem:[#allocation3 + $0x20] sm:$0xe]
      %v1955 = vld [vmem:[#allocation3 + $0x24] sm:$0x1]
      %v1956 = vld [vmem:[#allocation3 + $0x28] sm:$0xe]
      %v1957 = vld [vmem:[#allocation3 + $0x2c] sm:$0x1]
      %v1958 = vld [vmem:[#allocation3 + $0x30] sm:$0xe]
      %v1959 = vld [vmem:[#allocation3 + $0x34] sm:$0x1]
      %v1960 = vld [vmem:[#allocation3 + $0x38] sm:$0xe]
      %v1961 = vld [vmem:[#allocation3 + $0x3c] sm:$0x1]
      %v1978 = vrot.slane %v1946, 5
      %v1979 = vrot.slane %v1978, 4
      %v1980 = vrot.slane %v1947, 5
      %v1981 = vsel %vm781, %v1979, %v1980
      %v1982 = vrot.slane %v1948, 5
      %v1983 = vrot.slane %v1982, 4
      %v1984 = vrot.slane %v1949, 5
      %v1985 = vsel %vm781, %v1983, %v1984
      %v1986 = vrot.slane %v1950, 5
      %v1987 = vrot.slane %v1986, 4
      %v1988 = vrot.slane %v1951, 5
      %v1989 = vsel %vm781, %v1987, %v1988
      %v1990 = vrot.slane %v1952, 5
      %v1991 = vrot.slane %v1990, 4
      %v1992 = vrot.slane %v1953, 5
      %v1993 = vsel %vm781, %v1991, %v1992
      %v1994 = vrot.slane %v1954, 5
      %v1995 = vrot.slane %v1994, 4
      %v1996 = vrot.slane %v1955, 5
      %v1997 = vsel %vm781, %v1995, %v1996
      %v1998 = vrot.slane %v1956, 5
      %v1999 = vrot.slane %v1998, 4
      %v2000 = vrot.slane %v1957, 5
      %v2001 = vsel %vm781, %v1999, %v2000
      %v2002 = vrot.slane %v1958, 5
      %v2003 = vrot.slane %v2002, 4
      %v2004 = vrot.slane %v1959, 5
      %v2005 = vsel %vm781, %v2003, %v2004
      %v2006 = vrot.slane %v1960, 5
      %v2007 = vrot.slane %v2006, 4
      %v2008 = vrot.slane %v1961, 5
      %v2009 = vsel %vm781, %v2007, %v2008
      %2010 = vrot.lane.b32.xlu0 %v1981, 16
      %v2011 = vpop.permute.xlu0 %2010
      %2012 = vrot.lane.b32.xlu0 %v1985, 16
      %v2013 = vpop.permute.xlu0 %2012
      %2014 = vrot.lane.b32.xlu0 %v1989, 16
      %v2015 = vpop.permute.xlu0 %2014
      %2016 = vrot.lane.b32.xlu0 %v1993, 16
      %v2017 = vpop.permute.xlu0 %2016
      %2018 = vrot.lane.b32.xlu0 %v1997, 16
      %v2019 = vpop.permute.xlu0 %2018
      %2020 = vrot.lane.b32.xlu0 %v2001, 16
      %v2021 = vpop.permute.xlu0 %2020
      %2022 = vrot.lane.b32.xlu0 %v2005, 16
      %v2023 = vpop.permute.xlu0 %2022
      %2024 = vrot.lane.b32.xlu0 %v2009, 16
      %v2025 = vpop.permute.xlu0 %2024
      %vm2034 = vcmask 191616
      %2035 = vst.msk [vmem:[#allocation5] sm:$0xf] %vm2034, %v2011
      %2036 = vst.msk [vmem:[#allocation5 + $0x4] sm:$0xf] %vm2034, %v2013
      %2037 = vst.msk [vmem:[#allocation5 + $0x8] sm:$0xf] %vm2034, %v2015
      %2038 = vst.msk [vmem:[#allocation5 + $0xc] sm:$0xf] %vm2034, %v2017
      %2039 = vst.msk [vmem:[#allocation5 + $0x10] sm:$0xf] %vm2034, %v2019
      %2040 = vst.msk [vmem:[#allocation5 + $0x14] sm:$0xf] %vm2034, %v2021
      %2041 = vst.msk [vmem:[#allocation5 + $0x18] sm:$0xf] %vm2034, %v2023
      %2042 = vst.msk [vmem:[#allocation5 + $0x1c] sm:$0xf] %vm2034, %v2025
      %v2043 = vld [vmem:[%s294] sm:$0xf]
      %v2044 = vld [vmem:[%s294 + $0x8] sm:$0xf]
      %v2045 = vld [vmem:[%s294 + $0x10] sm:$0xf]
      %v2046 = vld [vmem:[%s294 + $0x18] sm:$0xf]
      %v2047 = vld [vmem:[%s294 + $0x20] sm:$0xf]
      %v2048 = vld [vmem:[%s294 + $0x28] sm:$0xf]
      %v2049 = vld [vmem:[%s294 + $0x30] sm:$0xf]
      %v2050 = vld [vmem:[%s294 + $0x38] sm:$0xf]
      %2059 = vrot.lane.b32.xlu0 %v2043, 24
      %v2060 = vpop.permute.xlu0 %2059
      %2061 = vrot.lane.b32.xlu0 %v2044, 24
      %v2062 = vpop.permute.xlu0 %2061
      %2063 = vrot.lane.b32.xlu0 %v2045, 24
      %v2064 = vpop.permute.xlu0 %2063
      %2065 = vrot.lane.b32.xlu0 %v2046, 24
      %v2066 = vpop.permute.xlu0 %2065
      %2067 = vrot.lane.b32.xlu0 %v2047, 24
      %v2068 = vpop.permute.xlu0 %2067
      %2069 = vrot.lane.b32.xlu0 %v2048, 24
      %v2070 = vpop.permute.xlu0 %2069
      %2071 = vrot.lane.b32.xlu0 %v2049, 24
      %v2072 = vpop.permute.xlu0 %2071
      %2073 = vrot.lane.b32.xlu0 %v2050, 24
      %v2074 = vpop.permute.xlu0 %2073
      %vm2083 = vcmask 257216
      %2084 = vst.msk [vmem:[#allocation5] sm:$0xf] %vm2083, %v2060
      %2085 = vst.msk [vmem:[#allocation5 + $0x4] sm:$0xf] %vm2083, %v2062
      %2086 = vst.msk [vmem:[#allocation5 + $0x8] sm:$0xf] %vm2083, %v2064
      %2087 = vst.msk [vmem:[#allocation5 + $0xc] sm:$0xf] %vm2083, %v2066
      %2088 = vst.msk [vmem:[#allocation5 + $0x10] sm:$0xf] %vm2083, %v2068
      %2089 = vst.msk [vmem:[#allocation5 + $0x14] sm:$0xf] %vm2083, %v2070
      %2090 = vst.msk [vmem:[#allocation5 + $0x18] sm:$0xf] %vm2083, %v2072
      %2091 = vst.msk [vmem:[#allocation5 + $0x1c] sm:$0xf] %vm2083, %v2074
      %v2092 = vld [vmem:[%s294] sm:$0xf]
      %v2093 = vld [vmem:[%s294 + $0x4] sm:$0x1]
      %v2094 = vld [vmem:[%s294 + $0x8] sm:$0xf]
      %v2095 = vld [vmem:[%s294 + $0xc] sm:$0x1]
      %v2096 = vld [vmem:[%s294 + $0x10] sm:$0xf]
      %v2097 = vld [vmem:[%s294 + $0x14] sm:$0x1]
      %v2098 = vld [vmem:[%s294 + $0x18] sm:$0xf]
      %v2099 = vld [vmem:[%s294 + $0x1c] sm:$0x1]
      %v2100 = vld [vmem:[%s294 + $0x20] sm:$0xf]
      %v2101 = vld [vmem:[%s294 + $0x24] sm:$0x1]
      %v2102 = vld [vmem:[%s294 + $0x28] sm:$0xf]
      %v2103 = vld [vmem:[%s294 + $0x2c] sm:$0x1]
      %v2104 = vld [vmem:[%s294 + $0x30] sm:$0xf]
      %v2105 = vld [vmem:[%s294 + $0x34] sm:$0x1]
      %v2106 = vld [vmem:[%s294 + $0x38] sm:$0xf]
      %v2107 = vld [vmem:[%s294 + $0x3c] sm:$0x1]
      %v2109 = vshrl.u32 %v2092, 16
      %v2111 = vrot.slane %v2109, 4
      %v2112 = vshll.u32 %v2092, 16
      %v2114 = vrot.slane %v2112, 5
      %v2115 = vor.u32 %v2111, %v2114
      %v2116 = vrot.slane %v2115, 4
      %v2118 = vshll.u32 %v2093, 16
      %v2120 = vrot.slane %v2118, 5
      %v2121 = vsel %vm601, %v2116, %v2120
      %v2123 = vshrl.u32 %v2094, 16
      %v2125 = vrot.slane %v2123, 4
      %v2126 = vshll.u32 %v2094, 16
      %v2128 = vrot.slane %v2126, 5
      %v2129 = vor.u32 %v2125, %v2128
      %v2130 = vrot.slane %v2129, 4
      %v2132 = vshll.u32 %v2095, 16
      %v2134 = vrot.slane %v2132, 5
      %v2135 = vsel %vm601, %v2130, %v2134
      %v2137 = vshrl.u32 %v2096, 16
      %v2139 = vrot.slane %v2137, 4
      %v2140 = vshll.u32 %v2096, 16
      %v2142 = vrot.slane %v2140, 5
      %v2143 = vor.u32 %v2139, %v2142
      %v2144 = vrot.slane %v2143, 4
      %v2146 = vshll.u32 %v2097, 16
      %v2148 = vrot.slane %v2146, 5
      %v2149 = vsel %vm601, %v2144, %v2148
      %v2151 = vshrl.u32 %v2098, 16
      %v2153 = vrot.slane %v2151, 4
      %v2154 = vshll.u32 %v2098, 16
      %v2156 = vrot.slane %v2154, 5
      %v2157 = vor.u32 %v2153, %v2156
      %v2158 = vrot.slane %v2157, 4
      %v2160 = vshll.u32 %v2099, 16
      %v2162 = vrot.slane %v2160, 5
      %v2163 = vsel %vm601, %v2158, %v2162
      %v2165 = vshrl.u32 %v2100, 16
      %v2167 = vrot.slane %v2165, 4
      %v2168 = vshll.u32 %v2100, 16
      %v2170 = vrot.slane %v2168, 5
      %v2171 = vor.u32 %v2167, %v2170
      %v2172 = vrot.slane %v2171, 4
      %v2174 = vshll.u32 %v2101, 16
      %v2176 = vrot.slane %v2174, 5
      %v2177 = vsel %vm601, %v2172, %v2176
      %v2179 = vshrl.u32 %v2102, 16
      %v2181 = vrot.slane %v2179, 4
      %v2182 = vshll.u32 %v2102, 16
      %v2184 = vrot.slane %v2182, 5
      %v2185 = vor.u32 %v2181, %v2184
      %v2186 = vrot.slane %v2185, 4
      %v2188 = vshll.u32 %v2103, 16
      %v2190 = vrot.slane %v2188, 5
      %v2191 = vsel %vm601, %v2186, %v2190
      %v2193 = vshrl.u32 %v2104, 16
      %v2195 = vrot.slane %v2193, 4
      %v2196 = vshll.u32 %v2104, 16
      %v2198 = vrot.slane %v2196, 5
      %v2199 = vor.u32 %v2195, %v2198
      %v2200 = vrot.slane %v2199, 4
      %v2202 = vshll.u32 %v2105, 16
      %v2204 = vrot.slane %v2202, 5
      %v2205 = vsel %vm601, %v2200, %v2204
      %v2207 = vshrl.u32 %v2106, 16
      %v2209 = vrot.slane %v2207, 4
      %v2210 = vshll.u32 %v2106, 16
      %v2212 = vrot.slane %v2210, 5
      %v2213 = vor.u32 %v2209, %v2212
      %v2214 = vrot.slane %v2213, 4
      %v2216 = vshll.u32 %v2107, 16
      %v2218 = vrot.slane %v2216, 5
      %v2219 = vsel %vm601, %v2214, %v2218
      %2220 = vrot.lane.b32.xlu0 %v2121, 32
      %v2221 = vpop.permute.xlu0 %2220
      %2222 = vrot.lane.b32.xlu0 %v2135, 32
      %v2223 = vpop.permute.xlu0 %2222
      %2224 = vrot.lane.b32.xlu0 %v2149, 32
      %v2225 = vpop.permute.xlu0 %2224
      %2226 = vrot.lane.b32.xlu0 %v2163, 32
      %v2227 = vpop.permute.xlu0 %2226
      %2228 = vrot.lane.b32.xlu0 %v2177, 32
      %v2229 = vpop.permute.xlu0 %2228
      %2230 = vrot.lane.b32.xlu0 %v2191, 32
      %v2231 = vpop.permute.xlu0 %2230
      %2232 = vrot.lane.b32.xlu0 %v2205, 32
      %v2233 = vpop.permute.xlu0 %2232
      %2234 = vrot.lane.b32.xlu0 %v2219, 32
      %v2235 = vpop.permute.xlu0 %2234
      %vm2244 = vcmask 322816
      %2245 = vst.msk [vmem:[#allocation5] sm:$0xf] %vm2244, %v2221
      %2246 = vst.msk [vmem:[#allocation5 + $0x4] sm:$0xf] %vm2244, %v2223
      %2247 = vst.msk [vmem:[#allocation5 + $0x8] sm:$0xf] %vm2244, %v2225
      %2248 = vst.msk [vmem:[#allocation5 + $0xc] sm:$0xf] %vm2244, %v2227
      %2249 = vst.msk [vmem:[#allocation5 + $0x10] sm:$0xf] %vm2244, %v2229
      %2250 = vst.msk [vmem:[#allocation5 + $0x14] sm:$0xf] %vm2244, %v2231
      %2251 = vst.msk [vmem:[#allocation5 + $0x18] sm:$0xf] %vm2244, %v2233
      %2252 = vst.msk [vmem:[#allocation5 + $0x1c] sm:$0xf] %vm2244, %v2235
      %v2253 = vld [vmem:[%s294] sm:$0xe]
      %v2254 = vld [vmem:[%s294 + $0x4] sm:$0x1]
      %v2255 = vld [vmem:[%s294 + $0x8] sm:$0xe]
      %v2256 = vld [vmem:[%s294 + $0xc] sm:$0x1]
      %v2257 = vld [vmem:[%s294 + $0x10] sm:$0xe]
      %v2258 = vld [vmem:[%s294 + $0x14] sm:$0x1]
      %v2259 = vld [vmem:[%s294 + $0x18] sm:$0xe]
      %v2260 = vld [vmem:[%s294 + $0x1c] sm:$0x1]
      %v2261 = vld [vmem:[%s294 + $0x20] sm:$0xe]
      %v2262 = vld [vmem:[%s294 + $0x24] sm:$0x1]
      %v2263 = vld [vmem:[%s294 + $0x28] sm:$0xe]
      %v2264 = vld [vmem:[%s294 + $0x2c] sm:$0x1]
      %v2265 = vld [vmem:[%s294 + $0x30] sm:$0xe]
      %v2266 = vld [vmem:[%s294 + $0x34] sm:$0x1]
      %v2267 = vld [vmem:[%s294 + $0x38] sm:$0xe]
      %v2268 = vld [vmem:[%s294 + $0x3c] sm:$0x1]
      %v2285 = vrot.slane %v2253, 5
      %v2286 = vrot.slane %v2285, 4
      %v2287 = vrot.slane %v2254, 5
      %v2288 = vsel %vm781, %v2286, %v2287
      %v2289 = vrot.slane %v2255, 5
      %v2290 = vrot.slane %v2289, 4
      %v2291 = vrot.slane %v2256, 5
      %v2292 = vsel %vm781, %v2290, %v2291
      %v2293 = vrot.slane %v2257, 5
      %v2294 = vrot.slane %v2293, 4
      %v2295 = vrot.slane %v2258, 5
      %v2296 = vsel %vm781, %v2294, %v2295
      %v2297 = vrot.slane %v2259, 5
      %v2298 = vrot.slane %v2297, 4
      %v2299 = vrot.slane %v2260, 5
      %v2300 = vsel %vm781, %v2298, %v2299
      %v2301 = vrot.slane %v2261, 5
      %v2302 = vrot.slane %v2301, 4
      %v2303 = vrot.slane %v2262, 5
      %v2304 = vsel %vm781, %v2302, %v2303
      %v2305 = vrot.slane %v2263, 5
      %v2306 = vrot.slane %v2305, 4
      %v2307 = vrot.slane %v2264, 5
      %v2308 = vsel %vm781, %v2306, %v2307
      %v2309 = vrot.slane %v2265, 5
      %v2310 = vrot.slane %v2309, 4
      %v2311 = vrot.slane %v2266, 5
      %v2312 = vsel %vm781, %v2310, %v2311
      %v2313 = vrot.slane %v2267, 5
      %v2314 = vrot.slane %v2313, 4
      %v2315 = vrot.slane %v2268, 5
      %v2316 = vsel %vm781, %v2314, %v2315
      %2317 = vrot.lane.b32.xlu0 %v2288, 40
      %v2318 = vpop.permute.xlu0 %2317
      %2319 = vrot.lane.b32.xlu0 %v2292, 40
      %v2320 = vpop.permute.xlu0 %2319
      %2321 = vrot.lane.b32.xlu0 %v2296, 40
      %v2322 = vpop.permute.xlu0 %2321
      %2323 = vrot.lane.b32.xlu0 %v2300, 40
      %v2324 = vpop.permute.xlu0 %2323
      %2325 = vrot.lane.b32.xlu0 %v2304, 40
      %v2326 = vpop.permute.xlu0 %2325
      %2327 = vrot.lane.b32.xlu0 %v2308, 40
      %v2328 = vpop.permute.xlu0 %2327
      %2329 = vrot.lane.b32.xlu0 %v2312, 40
      %v2330 = vpop.permute.xlu0 %2329
      %2331 = vrot.lane.b32.xlu0 %v2316, 40
      %v2332 = vpop.permute.xlu0 %2331
      %vm2341 = vcmask 388416
      %2342 = vst.msk [vmem:[#allocation5] sm:$0xf] %vm2341, %v2318
      %2343 = vst.msk [vmem:[#allocation5 + $0x4] sm:$0xf] %vm2341, %v2320
      %2344 = vst.msk [vmem:[#allocation5 + $0x8] sm:$0xf] %vm2341, %v2322
      %2345 = vst.msk [vmem:[#allocation5 + $0xc] sm:$0xf] %vm2341, %v2324
      %2346 = vst.msk [vmem:[#allocation5 + $0x10] sm:$0xf] %vm2341, %v2326
      %2347 = vst.msk [vmem:[#allocation5 + $0x14] sm:$0xf] %vm2341, %v2328
      %2348 = vst.msk [vmem:[#allocation5 + $0x18] sm:$0xf] %vm2341, %v2330
      %2349 = vst.msk [vmem:[#allocation5 + $0x1c] sm:$0xf] %vm2341, %v2332
      %s2350 = scalar_lea.vmem [#allocation3], 16
      %v2351 = vld [vmem:[%s2350] sm:$0xf]
      %v2352 = vld [vmem:[%s2350 + $0x8] sm:$0xf]
      %v2353 = vld [vmem:[%s2350 + $0x10] sm:$0xf]
      %v2354 = vld [vmem:[%s2350 + $0x18] sm:$0xf]
      %v2355 = vld [vmem:[%s2350 + $0x20] sm:$0xf]
      %v2356 = vld [vmem:[%s2350 + $0x28] sm:$0xf]
      %v2357 = vld [vmem:[%s2350 + $0x30] sm:$0xf]
      %v2358 = vld [vmem:[%s2350 + $0x38] sm:$0xf]
      %2367 = vrot.lane.b32.xlu0 %v2351, 48
      %v2368 = vpop.permute.xlu0 %2367
      %2369 = vrot.lane.b32.xlu0 %v2352, 48
      %v2370 = vpop.permute.xlu0 %2369
      %2371 = vrot.lane.b32.xlu0 %v2353, 48
      %v2372 = vpop.permute.xlu0 %2371
      %2373 = vrot.lane.b32.xlu0 %v2354, 48
      %v2374 = vpop.permute.xlu0 %2373
      %2375 = vrot.lane.b32.xlu0 %v2355, 48
      %v2376 = vpop.permute.xlu0 %2375
      %2377 = vrot.lane.b32.xlu0 %v2356, 48
      %v2378 = vpop.permute.xlu0 %2377
      %2379 = vrot.lane.b32.xlu0 %v2357, 48
      %v2380 = vpop.permute.xlu0 %2379
      %2381 = vrot.lane.b32.xlu0 %v2358, 48
      %v2382 = vpop.permute.xlu0 %2381
      %vm2391 = vcmask 454016
      %2392 = vst.msk [vmem:[#allocation5] sm:$0xf] %vm2391, %v2368
      %2393 = vst.msk [vmem:[#allocation5 + $0x4] sm:$0xf] %vm2391, %v2370
      %2394 = vst.msk [vmem:[#allocation5 + $0x8] sm:$0xf] %vm2391, %v2372
      %2395 = vst.msk [vmem:[#allocation5 + $0xc] sm:$0xf] %vm2391, %v2374
      %2396 = vst.msk [vmem:[#allocation5 + $0x10] sm:$0xf] %vm2391, %v2376
      %2397 = vst.msk [vmem:[#allocation5 + $0x14] sm:$0xf] %vm2391, %v2378
      %2398 = vst.msk [vmem:[#allocation5 + $0x18] sm:$0xf] %vm2391, %v2380
      %2399 = vst.msk [vmem:[#allocation5 + $0x1c] sm:$0xf] %vm2391, %v2382
      %v2400 = vld [vmem:[%s2350] sm:$0xf]
      %v2401 = vld [vmem:[%s2350 + $0x4] sm:$0x1]
      %v2402 = vld [vmem:[%s2350 + $0x8] sm:$0xf]
      %v2403 = vld [vmem:[%s2350 + $0xc] sm:$0x1]
      %v2404 = vld [vmem:[%s2350 + $0x10] sm:$0xf]
      %v2405 = vld [vmem:[%s2350 + $0x14] sm:$0x1]
      %v2406 = vld [vmem:[%s2350 + $0x18] sm:$0xf]
      %v2407 = vld [vmem:[%s2350 + $0x1c] sm:$0x1]
      %v2408 = vld [vmem:[%s2350 + $0x20] sm:$0xf]
      %v2409 = vld [vmem:[%s2350 + $0x24] sm:$0x1]
      %v2410 = vld [vmem:[%s2350 + $0x28] sm:$0xf]
      %v2411 = vld [vmem:[%s2350 + $0x2c] sm:$0x1]
      %v2412 = vld [vmem:[%s2350 + $0x30] sm:$0xf]
      %v2413 = vld [vmem:[%s2350 + $0x34] sm:$0x1]
      %v2414 = vld [vmem:[%s2350 + $0x38] sm:$0xf]
      %v2415 = vld [vmem:[%s2350 + $0x3c] sm:$0x1]
      %v2417 = vshrl.u32 %v2400, 16
      %v2419 = vrot.slane %v2417, 4
      %v2420 = vshll.u32 %v2400, 16
      %v2422 = vrot.slane %v2420, 5
      %v2423 = vor.u32 %v2419, %v2422
      %v2424 = vrot.slane %v2423, 4
      %v2426 = vshll.u32 %v2401, 16
      %v2428 = vrot.slane %v2426, 5
      %v2429 = vsel %vm601, %v2424, %v2428
      %v2431 = vshrl.u32 %v2402, 16
      %v2433 = vrot.slane %v2431, 4
      %v2434 = vshll.u32 %v2402, 16
      %v2436 = vrot.slane %v2434, 5
      %v2437 = vor.u32 %v2433, %v2436
      %v2438 = vrot.slane %v2437, 4
      %v2440 = vshll.u32 %v2403, 16
      %v2442 = vrot.slane %v2440, 5
      %v2443 = vsel %vm601, %v2438, %v2442
      %v2445 = vshrl.u32 %v2404, 16
      %v2447 = vrot.slane %v2445, 4
      %v2448 = vshll.u32 %v2404, 16
      %v2450 = vrot.slane %v2448, 5
      %v2451 = vor.u32 %v2447, %v2450
      %v2452 = vrot.slane %v2451, 4
      %v2454 = vshll.u32 %v2405, 16
      %v2456 = vrot.slane %v2454, 5
      %v2457 = vsel %vm601, %v2452, %v2456
      %v2459 = vshrl.u32 %v2406, 16
      %v2461 = vrot.slane %v2459, 4
      %v2462 = vshll.u32 %v2406, 16
      %v2464 = vrot.slane %v2462, 5
      %v2465 = vor.u32 %v2461, %v2464
      %v2466 = vrot.slane %v2465, 4
      %v2468 = vshll.u32 %v2407, 16
      %v2470 = vrot.slane %v2468, 5
      %v2471 = vsel %vm601, %v2466, %v2470
      %v2473 = vshrl.u32 %v2408, 16
      %v2475 = vrot.slane %v2473, 4
      %v2476 = vshll.u32 %v2408, 16
      %v2478 = vrot.slane %v2476, 5
      %v2479 = vor.u32 %v2475, %v2478
      %v2480 = vrot.slane %v2479, 4
      %v2482 = vshll.u32 %v2409, 16
      %v2484 = vrot.slane %v2482, 5
      %v2485 = vsel %vm601, %v2480, %v2484
      %v2487 = vshrl.u32 %v2410, 16
      %v2489 = vrot.slane %v2487, 4
      %v2490 = vshll.u32 %v2410, 16
      %v2492 = vrot.slane %v2490, 5
      %v2493 = vor.u32 %v2489, %v2492
      %v2494 = vrot.slane %v2493, 4
      %v2496 = vshll.u32 %v2411, 16
      %v2498 = vrot.slane %v2496, 5
      %v2499 = vsel %vm601, %v2494, %v2498
      %v2501 = vshrl.u32 %v2412, 16
      %v2503 = vrot.slane %v2501, 4
      %v2504 = vshll.u32 %v2412, 16
      %v2506 = vrot.slane %v2504, 5
      %v2507 = vor.u32 %v2503, %v2506
      %v2508 = vrot.slane %v2507, 4
      %v2510 = vshll.u32 %v2413, 16
      %v2512 = vrot.slane %v2510, 5
      %v2513 = vsel %vm601, %v2508, %v2512
      %v2515 = vshrl.u32 %v2414, 16
      %v2517 = vrot.slane %v2515, 4
      %v2518 = vshll.u32 %v2414, 16
      %v2520 = vrot.slane %v2518, 5
      %v2521 = vor.u32 %v2517, %v2520
      %v2522 = vrot.slane %v2521, 4
      %v2524 = vshll.u32 %v2415, 16
      %v2526 = vrot.slane %v2524, 5
      %v2527 = vsel %vm601, %v2522, %v2526
      %2528 = vrot.lane.b32.xlu0 %v2429, 56
      %v2529 = vpop.permute.xlu0 %2528
      %2530 = vrot.lane.b32.xlu0 %v2443, 56
      %v2531 = vpop.permute.xlu0 %2530
      %2532 = vrot.lane.b32.xlu0 %v2457, 56
      %v2533 = vpop.permute.xlu0 %2532
      %2534 = vrot.lane.b32.xlu0 %v2471, 56
      %v2535 = vpop.permute.xlu0 %2534
      %2536 = vrot.lane.b32.xlu0 %v2485, 56
      %v2537 = vpop.permute.xlu0 %2536
      %2538 = vrot.lane.b32.xlu0 %v2499, 56
      %v2539 = vpop.permute.xlu0 %2538
      %2540 = vrot.lane.b32.xlu0 %v2513, 56
      %v2541 = vpop.permute.xlu0 %2540
      %2542 = vrot.lane.b32.xlu0 %v2527, 56
      %v2543 = vpop.permute.xlu0 %2542
      %vm2552 = vcmask 519616
      %2553 = vst.msk [vmem:[#allocation5] sm:$0xf] %vm2552, %v2529
      %2554 = vst.msk [vmem:[#allocation5 + $0x4] sm:$0xf] %vm2552, %v2531
      %2555 = vst.msk [vmem:[#allocation5 + $0x8] sm:$0xf] %vm2552, %v2533
      %2556 = vst.msk [vmem:[#allocation5 + $0xc] sm:$0xf] %vm2552, %v2535
      %2557 = vst.msk [vmem:[#allocation5 + $0x10] sm:$0xf] %vm2552, %v2537
      %2558 = vst.msk [vmem:[#allocation5 + $0x14] sm:$0xf] %vm2552, %v2539
      %2559 = vst.msk [vmem:[#allocation5 + $0x18] sm:$0xf] %vm2552, %v2541
      %2560 = vst.msk [vmem:[#allocation5 + $0x1c] sm:$0xf] %vm2552, %v2543
      %v2561 = vld [vmem:[%s2350] sm:$0xe]
      %v2562 = vld [vmem:[%s2350 + $0x4] sm:$0x1]
      %v2563 = vld [vmem:[%s2350 + $0x8] sm:$0xe]
      %v2564 = vld [vmem:[%s2350 + $0xc] sm:$0x1]
      %v2565 = vld [vmem:[%s2350 + $0x10] sm:$0xe]
      %v2566 = vld [vmem:[%s2350 + $0x14] sm:$0x1]
      %v2567 = vld [vmem:[%s2350 + $0x18] sm:$0xe]
      %v2568 = vld [vmem:[%s2350 + $0x1c] sm:$0x1]
      %v2569 = vld [vmem:[%s2350 + $0x20] sm:$0xe]
      %v2570 = vld [vmem:[%s2350 + $0x24] sm:$0x1]
      %v2571 = vld [vmem:[%s2350 + $0x28] sm:$0xe]
      %v2572 = vld [vmem:[%s2350 + $0x2c] sm:$0x1]
      %v2573 = vld [vmem:[%s2350 + $0x30] sm:$0xe]
      %v2574 = vld [vmem:[%s2350 + $0x34] sm:$0x1]
      %v2575 = vld [vmem:[%s2350 + $0x38] sm:$0xe]
      %v2576 = vld [vmem:[%s2350 + $0x3c] sm:$0x1]
      %v2593 = vrot.slane %v2561, 5
      %v2594 = vrot.slane %v2593, 4
      %v2595 = vrot.slane %v2562, 5
      %v2596 = vsel %vm781, %v2594, %v2595
      %v2597 = vrot.slane %v2563, 5
      %v2598 = vrot.slane %v2597, 4
      %v2599 = vrot.slane %v2564, 5
      %v2600 = vsel %vm781, %v2598, %v2599
      %v2601 = vrot.slane %v2565, 5
      %v2602 = vrot.slane %v2601, 4
      %v2603 = vrot.slane %v2566, 5
      %v2604 = vsel %vm781, %v2602, %v2603
      %v2605 = vrot.slane %v2567, 5
      %v2606 = vrot.slane %v2605, 4
      %v2607 = vrot.slane %v2568, 5
      %v2608 = vsel %vm781, %v2606, %v2607
      %v2609 = vrot.slane %v2569, 5
      %v2610 = vrot.slane %v2609, 4
      %v2611 = vrot.slane %v2570, 5
      %v2612 = vsel %vm781, %v2610, %v2611
      %v2613 = vrot.slane %v2571, 5
      %v2614 = vrot.slane %v2613, 4
      %v2615 = vrot.slane %v2572, 5
      %v2616 = vsel %vm781, %v2614, %v2615
      %v2617 = vrot.slane %v2573, 5
      %v2618 = vrot.slane %v2617, 4
      %v2619 = vrot.slane %v2574, 5
      %v2620 = vsel %vm781, %v2618, %v2619
      %v2621 = vrot.slane %v2575, 5
      %v2622 = vrot.slane %v2621, 4
      %v2623 = vrot.slane %v2576, 5
      %v2624 = vsel %vm781, %v2622, %v2623
      %2625 = vrot.lane.b32.xlu0 %v2596, 64
      %v2626 = vpop.permute.xlu0 %2625
      %2627 = vrot.lane.b32.xlu0 %v2600, 64
      %v2628 = vpop.permute.xlu0 %2627
      %2629 = vrot.lane.b32.xlu0 %v2604, 64
      %v2630 = vpop.permute.xlu0 %2629
      %2631 = vrot.lane.b32.xlu0 %v2608, 64
      %v2632 = vpop.permute.xlu0 %2631
      %2633 = vrot.lane.b32.xlu0 %v2612, 64
      %v2634 = vpop.permute.xlu0 %2633
      %2635 = vrot.lane.b32.xlu0 %v2616, 64
      %v2636 = vpop.permute.xlu0 %2635
      %2637 = vrot.lane.b32.xlu0 %v2620, 64
      %v2638 = vpop.permute.xlu0 %2637
      %2639 = vrot.lane.b32.xlu0 %v2624, 64
      %v2640 = vpop.permute.xlu0 %2639
      %vm2649 = vcmask 585216
      %2650 = vst.msk [vmem:[#allocation5] sm:$0xf] %vm2649, %v2626
      %2651 = vst.msk [vmem:[#allocation5 + $0x4] sm:$0xf] %vm2649, %v2628
      %2652 = vst.msk [vmem:[#allocation5 + $0x8] sm:$0xf] %vm2649, %v2630
      %2653 = vst.msk [vmem:[#allocation5 + $0xc] sm:$0xf] %vm2649, %v2632
      %2654 = vst.msk [vmem:[#allocation5 + $0x10] sm:$0xf] %vm2649, %v2634
      %2655 = vst.msk [vmem:[#allocation5 + $0x14] sm:$0xf] %vm2649, %v2636
      %2656 = vst.msk [vmem:[#allocation5 + $0x18] sm:$0xf] %vm2649, %v2638
      %2657 = vst.msk [vmem:[#allocation5 + $0x1c] sm:$0xf] %vm2649, %v2640
      %v2658 = vld [vmem:[#allocation5] sm:$0xf]
      %v2659 = vld [vmem:[#allocation5 + $0x4] sm:$0xf]
      %v2660 = vld [vmem:[#allocation5 + $0x8] sm:$0xf]
      %v2661 = vld [vmem:[#allocation5 + $0xc] sm:$0xf]
      %v2662 = vld [vmem:[#allocation5 + $0x10] sm:$0xf]
      %v2663 = vld [vmem:[#allocation5 + $0x14] sm:$0xf]
      %v2664 = vld [vmem:[#allocation5 + $0x18] sm:$0xf]
      %v2665 = vld [vmem:[#allocation5 + $0x1c] sm:$0xf]
      %v2666 = vld [vmem:[%s3] sm:$0xf]
      %v2667 = vld [vmem:[%s3 + $0x4] sm:$0xf]
      %v2668 = vld [vmem:[%s3 + $0x8] sm:$0xf]
      %v2669 = vld [vmem:[%s3 + $0xc] sm:$0xf]
      %v2670 = vld [vmem:[%s3 + $0x10] sm:$0xf]
      %v2671 = vld [vmem:[%s3 + $0x14] sm:$0xf]
      %v2672 = vld [vmem:[%s3 + $0x18] sm:$0xf]
      %v2673 = vld [vmem:[%s3 + $0x1c] sm:$0xf]
      %v2674 = vld [vmem:[%s3 + $0x20] sm:$0xf]
      %v2675 = vld [vmem:[%s4] sm:$0x1]
      %v2677 = vlaneseq
      %v2678 = vshrl.u32 %v2677, 7
      %v2679 = vsub.s32 0, %v2678
      %v2680 = vrot.slane %v2675, %v2679
      %v2690 = vunpack.c.l.b16 %v2658
      %v2691 = vunpack.c.l.b16 %v2659
      %v2692 = vunpack.c.l.b16 %v2660
      %v2693 = vunpack.c.l.b16 %v2661
      %v2694 = vunpack.c.l.b16 %v2662
      %v2695 = vunpack.c.l.b16 %v2663
      %v2696 = vunpack.c.l.b16 %v2664
      %v2697 = vunpack.c.l.b16 %v2665
      %v2698 = vpack.c.b16 %v2691, %v2690
      %v2699 = vpack.c.b16 %v2693, %v2692
      %v2700 = vpack.c.b16 %v2695, %v2694
      %v2701 = vpack.c.b16 %v2697, %v2696
      %v2711 = vunpack.c.l.b16 %v2666
      %v2712 = vunpack.c.l.b16 %v2667
      %v2713 = vunpack.c.l.b16 %v2668
      %v2714 = vunpack.c.l.b16 %v2669
      %v2715 = vunpack.c.l.b16 %v2670
      %v2716 = vunpack.c.l.b16 %v2671
      %v2717 = vunpack.c.l.b16 %v2672
      %v2718 = vunpack.c.l.b16 %v2673
      %v2719 = vunpack.c.l.b16 %v2674
      %v2720 = vpack.c.b16 %v2712, %v2711
      %v2721 = vpack.c.b16 %v2714, %v2713
      %v2722 = vpack.c.b16 %v2716, %v2715
      %v2723 = vpack.c.b16 %v2718, %v2717
      %v2724 = vpack.c.b16 %v2719, %v2719
      %vm2729 = vcmask 588800
      %v2731 = vsel %vm2729, %v2698, 0
      %v2734 = vsel %vm2729, %v2699, 0
      %v2737 = vsel %vm2729, %v2700, 0
      %v2740 = vsel %vm2729, %v2701, 0
      %vm2742 = vcmask 1043456
      %v2744 = vsel %vm2742, %v2724, 0
      %2746 = vmatprep.subr.bf16.mxu0 0
      %2747 = vmatpush1.bf16.msra.mxu0 %v2720
      %2748 = vmatprep.subr.bf16.mxu0 0
      %2749 = vmatpush1.bf16.msra.mxu0 %v2721
      %2750 = vmatprep.subr.bf16.mxu0 0
      %2751 = vmatpush1.bf16.msra.mxu0 %v2722
      %2752 = vmatprep.subr.bf16.mxu0 0
      %2753 = vmatpush1.bf16.msra.mxu0 %v2723
      %2754 = vmatprep.subr.bf16.mxu0 0
      %2755 = vmatpush1.bf16.msra.mxu0 %v2744
      %2756 = vmatprep.subr.bf16.mxu0 0
      %2757 = vmatpush1.bf16.msra.mxu0 0
      %2758 = vmatprep.subr.bf16.mxu0 0
      %2759 = vmatpush1.bf16.msra.mxu0 0
      %2760 = vmatprep.subr.bf16.mxu0 0
      %2761 = vmatpush1.bf16.msra.mxu0 0
      %2762 = vmatprep.subr.bf16.mxu0 0
      %2763 = vmatpush1.bf16.msra.mxu0 0
      %2764 = vmatprep.subr.bf16.mxu0 0
      %2765 = vmatpush1.bf16.msra.mxu0 0
      %2766 = vmatprep.subr.bf16.mxu0 0
      %2767 = vmatpush1.bf16.msra.mxu0 0
      %2768 = vmatprep.subr.bf16.mxu0 0
      %2769 = vmatpush1.bf16.msra.mxu0 0
      %2770 = vmatprep.subr.bf16.mxu0 0
      %2771 = vmatpush1.bf16.msra.mxu0 0
      %2772 = vmatprep.subr.bf16.mxu0 0
      %2773 = vmatpush1.bf16.msra.mxu0 0
      %2774 = vmatprep.subr.bf16.mxu0 0
      %2775 = vmatpush1.bf16.msra.mxu0 0
      %2776 = vmatprep.subr.bf16.mxu0 0
      %2777 = vmatpush1.bf16.msra.mxu0 0
      %2778 = vmatprep.mubr.bf16.mxu0 0
      %2779 = vmatmul.mubr.bf16.gmra.mrb[0].mxu0 %v2731
      %v2780 = vpop.f32.mrb[0].mxu0
      %v2781 = vadd.f32 %v2680, %v2780
      %v2782 = vpop.f32.mrb[0].mxu0
      %v2783 = vpop.f32.mrb[0].mxu0
      %v2784 = vadd.f32 %v2680, %v2783
      %v2785 = vpop.f32.mrb[0].mxu0
      %2786 = vmatprep.mubr.bf16.mxu0 0
      %2787 = vmatmul.mubr.bf16.gmra.mrb[0].mxu0 %v2734
      %v2788 = vpop.f32.mrb[0].mxu0
      %v2789 = vadd.f32 %v2680, %v2788
      %v2790 = vpop.f32.mrb[0].mxu0
      %v2791 = vpop.f32.mrb[0].mxu0
      %v2792 = vadd.f32 %v2680, %v2791
      %v2793 = vpop.f32.mrb[0].mxu0
      %2794 = vmatprep.mubr.bf16.mxu0 0
      %2795 = vmatmul.mubr.bf16.gmra.mrb[0].mxu0 %v2737
      %v2796 = vpop.f32.mrb[0].mxu0
      %v2797 = vadd.f32 %v2680, %v2796
      %v2798 = vpop.f32.mrb[0].mxu0
      %v2799 = vpop.f32.mrb[0].mxu0
      %v2800 = vadd.f32 %v2680, %v2799
      %v2801 = vpop.f32.mrb[0].mxu0
      %2802 = vmatprep.mubr.bf16.mxu0 0
      %2803 = vmatmul.mubr.bf16.gmra.mrb[0].mxu0 %v2740
      %v2804 = vpop.f32.mrb[0].mxu0
      %v2805 = vadd.f32 %v2680, %v2804
      %v2806 = vpop.f32.mrb[0].mxu0
      %v2807 = vpop.f32.mrb[0].mxu0
      %v2808 = vadd.f32 %v2680, %v2807
      %v2809 = vpop.f32.mrb[0].mxu0
      %2810 = vdwg.mxu0
      %v2811 = vmax.f32 %v2781, 0.0
      %v2812 = vmax.f32 %v2784, 0.0
      %v2813 = vmax.f32 %v2789, 0.0
      %v2814 = vmax.f32 %v2792, 0.0
      %v2815 = vmax.f32 %v2797, 0.0
      %v2816 = vmax.f32 %v2800, 0.0
      %v2817 = vmax.f32 %v2805, 0.0
      %v2818 = vmax.f32 %v2808, 0.0
      %vm2819 = vcmask 64512
      %2820 = vst.msk [vmem:[%s224] sm:$0xff] %vm2819, %v2811
      %2821 = vst.msk [vmem:[%s224 + $0x8] sm:$0xff] %vm2819, %v2812
      %2822 = vst.msk [vmem:[%s224 + $0x10] sm:$0xff] %vm2819, %v2813
      %2823 = vst.msk [vmem:[%s224 + $0x18] sm:$0xff] %vm2819, %v2814
      %2824 = vst.msk [vmem:[%s224 + $0x20] sm:$0xff] %vm2819, %v2815
      %2825 = vst.msk [vmem:[%s224 + $0x28] sm:$0xff] %vm2819, %v2816
      %2826 = vst.msk [vmem:[%s224 + $0x30] sm:$0xff] %vm2819, %v2817
      %2827 = vst.msk [vmem:[%s224 + $0x38] sm:$0xff] %vm2819, %v2818
      %p2828 = scmp.lt.s32.totalorder %s16, 1
      %s2829 = scalar_select %p2828, %s16, 1
      %s2830 = smul.addr %s2829, 8
      %s2831 = smul.addr %s2830, 8
      %s2832 = scalar_lea.vmem %s5, %s2831
      // Predicated region
      $region41: #{tpu_custom_call.1} parent=39 // pred_check
        %p2833 = pneg %p144
      $region42: #{tpu_custom_call.1} parent=39 // pred_check_branch
        %2835 = sbr.rel (%p2833) target = $region44
      $region43: #{tpu_custom_call.1} parent=39 // pred_region
        _
      $region44: #{tpu_custom_call.1} parent=39 // pred_fallthru
        _
    $region40: #{tpu_custom_call.1} parent=5 // pred_fallthru
      _
    %p2836 = scmp.le.s32.totalorder 2, %s11
    // Predicated region
    $region45: #{tpu_custom_call.1} parent=5 // pred_check
      %p2837 = pneg %p2836
    $region46: #{tpu_custom_call.1} parent=5 // pred_check_branch
      %2839 = sbr.rel (%p2837) target = $region48
    $region47: #{tpu_custom_call.1} parent=5 // pred_region
      %s2840 = ssub.s32 %s11, 2
      // Predicated region
      $region49: #{tpu_custom_call.1} parent=47 // pred_check
        %p2841 = pneg %p150
      $region50: #{tpu_custom_call.1} parent=47 // pred_check_branch
        %2843 = sbr.rel (%p2841) target = $region52
      $region51: #{tpu_custom_call.1} parent=47 // pred_region
        %p2844 = scmp.lt.s32.totalorder %s17, 1
        %s2845 = scalar_select %p2844, %s17, 1
        %s2846 = smul.addr %s2845, 8
        %s2847 = smul.addr %s2846, 8
        %s2848 = scalar_lea.vmem %s5, %s2847
      $region52: #{tpu_custom_call.1} parent=47 // pred_fallthru
        _
    $region48: #{tpu_custom_call.1} parent=5 // pred_fallthru
      _
  $region6: #{tpu_custom_call.1} parent=0 // loop_footer
    %s15 = sadd.s32 1, %s11
  $region7: #{tpu_custom_call.1} parent=0 // loop_footer_branch
    %10 = sbr.rel target = $region3
  $region8: #{tpu_custom_call.1} parent=0 // loop_exit
    _

</llo_original>
